<compile_context>
chip_gen: v7x
topology: tpu7x:2x2x1
jax: 0.10.0
libtpu: 0.0.40
codegen_flags: <defaults>
</compile_context>

<pallas_src>
import jax
import jax.numpy as jnp
from jax.experimental import pallas as pl
from jax.experimental.pallas import tpu as pltpu

LANES = 128  # vreg lane width / padded output-feature dim


def _round_up(x, m):
    return (x + m - 1) // m * m


def _m_tiling(M, bm):
    """Pick a row-block size (multiple of 8) and padded row count."""
    block_m = min(bm, _round_up(M, 8))
    return block_m, _round_up(M, block_m)


def _compiler_params():
    return pltpu.CompilerParams(
        dimension_semantics=("parallel",),      # shard M-grid across TCs (v7x)
        vmem_limit_bytes=32 * 1024 * 1024,      # well within v7x's 64 MiB VMEM
    )


# ----------------------------- Pallas kernels ------------------------------

def _conv_pool_kernel(p_ref, w_ref, b_ref, o_ref):
    """Fused conv(+bias)+ReLU+2x2 max-pool.

    p_ref: (4, block_m, K_pad) im2col patches for the four pool phases of the
    same pooled output rows.  The pool is an elementwise max of the four conv
    results (bias add and ReLU commute with the max)."""
    w = w_ref[...]
    y0 = jnp.dot(p_ref[0], w, preferred_element_type=jnp.float32)
    y1 = jnp.dot(p_ref[1], w, preferred_element_type=jnp.float32)
    y2 = jnp.dot(p_ref[2], w, preferred_element_type=jnp.float32)
    y3 = jnp.dot(p_ref[3], w, preferred_element_type=jnp.float32)
    y = jnp.maximum(jnp.maximum(y0, y1), jnp.maximum(y2, y3))
    o_ref[...] = jnp.maximum(y + b_ref[...], 0.0).astype(o_ref.dtype)


def _fc_stack_kernel(x_ref, w1_ref, b1_ref, w2_ref, b2_ref, w3_ref, b3_ref,
                     o_ref):
    """Fused fc1->ReLU->fc2->ReLU->fc3; intermediates stay VMEM resident."""
    h = jnp.dot(x_ref[...], w1_ref[...], preferred_element_type=jnp.float32)
    h = jnp.maximum(h + b1_ref[...], 0.0)
    h = jnp.dot(h, w2_ref[...], preferred_element_type=jnp.float32)
    h = jnp.maximum(h + b2_ref[...], 0.0)
    h = jnp.dot(h, w3_ref[...], preferred_element_type=jnp.float32)
    o_ref[...] = (h + b3_ref[...]).astype(o_ref.dtype)


# ------------------------------ conv wrapper --------------------------------

def _im2col_pool_phases(x, k):
    """x: (B,H,W,C) -> (4, B*OH2*OW2, k*k*C); phase order
    (0,0),(0,1),(1,0),(1,1); patch-feature order (ki, kj, c)."""
    B, H, W, C = x.shape
    OH, OW = H - k + 1, W - k + 1
    OH2, OW2 = OH // 2, OW // 2
    slabs = [x[:, di:di + OH, dj:dj + OW, :]
             for di in range(k) for dj in range(k)]
    p = jnp.stack(slabs, axis=3).reshape(B, OH, OW, k * k * C)
    phases = [
        p[:, pi::2, pj::2, :].reshape(B * OH2 * OW2, k * k * C)
        for pi in range(2) for pj in range(2)
    ]
    return jnp.stack(phases, axis=0), OH2, OW2


def conv_relu_pool(x_nhwc, w_pad, b_pad, *, k, cout, bm=512):
    """Fused Conv2d(stride 1, valid) + ReLU + MaxPool2d(2,2).

    x_nhwc: (B,H,W,Cin) f32; w_pad: (round_up(Cin*k*k,8), 128) f32 (zero
    padded); b_pad: (1,128).  Returns (B, (H-k+1)//2, (W-k+1)//2, cout)."""
    assert cout <= LANES
    B, H, W, Cin = x_nhwc.shape
    K = Cin * k * k
    K_pad, N_pad = w_pad.shape
    assert K_pad == _round_up(K, 8) and N_pad == LANES

    phases, OH2, OW2 = _im2col_pool_phases(x_nhwc, k)
    M = B * OH2 * OW2
    block_m, M_pad = _m_tiling(M, bm)
    grid_m = M_pad // block_m
    phases = jnp.pad(phases, ((0, 0), (0, M_pad - M), (0, K_pad - K)))

    out = pl.pallas_call(
        _conv_pool_kernel,
        out_shape=jax.ShapeDtypeStruct((M_pad, N_pad), jnp.float32),
        grid_spec=pltpu.PrefetchScalarGridSpec(
            num_scalar_prefetch=0,
            grid=(grid_m,),
            in_specs=[
                pl.BlockSpec((4, block_m, K_pad), lambda i: (0, i, 0)),
                pl.BlockSpec((K_pad, N_pad), lambda i: (0, 0)),
                pl.BlockSpec((1, N_pad), lambda i: (0, 0)),
            ],
            out_specs=pl.BlockSpec((block_m, N_pad), lambda i: (i, 0)),
        ),
        compiler_params=_compiler_params(),
        cost_estimate=pl.CostEstimate(
            flops=2 * 4 * M_pad * K_pad * N_pad,
            transcendentals=0,
            bytes_accessed=4 * (4 * M_pad * K_pad + K_pad * N_pad
                                + M_pad * N_pad),
        ),
    )(phases, w_pad, b_pad)
    return out[:M, :cout].reshape(B, OH2, OW2, cout)


# ------------------------------- fc wrapper ----------------------------------

def fc_stack(x, w1, b1, w2, b2, w3, b3, *, n_out, bm=256):
    """x: (B, 256) f32; weights pre-transposed/zero-padded to lane-dense
    shapes (K,128)/(128,128)/(128,128).  Returns (B, n_out)."""
    B, K = x.shape
    block_m, M_pad = _m_tiling(B, bm)
    grid_m = M_pad // block_m
    x_pad = jnp.pad(x, ((0, M_pad - B), (0, 0)))

    out = pl.pallas_call(
        _fc_stack_kernel,
        out_shape=jax.ShapeDtypeStruct((M_pad, LANES), jnp.float32),
        grid_spec=pltpu.PrefetchScalarGridSpec(
            num_scalar_prefetch=0,
            grid=(grid_m,),
            in_specs=[
                pl.BlockSpec((block_m, K), lambda i: (i, 0)),
                pl.BlockSpec((K, LANES), lambda i: (0, 0)),
                pl.BlockSpec((1, LANES), lambda i: (0, 0)),
                pl.BlockSpec((LANES, LANES), lambda i: (0, 0)),
                pl.BlockSpec((1, LANES), lambda i: (0, 0)),
                pl.BlockSpec((LANES, LANES), lambda i: (0, 0)),
                pl.BlockSpec((1, LANES), lambda i: (0, 0)),
            ],
            out_specs=pl.BlockSpec((block_m, LANES), lambda i: (i, 0)),
        ),
        compiler_params=_compiler_params(),
        cost_estimate=pl.CostEstimate(
            flops=2 * M_pad * (K * LANES + LANES * LANES + LANES * LANES),
            transcendentals=0,
            bytes_accessed=4 * (M_pad * K + K * LANES + 2 * LANES * LANES
                                + M_pad * LANES),
        ),
    )(x_pad, w1, b1, w2, b2, w3, b3)
    return out[:B, :n_out]


# --------------------------------- params ------------------------------------

def init_params(key):
    """Deterministic PyTorch-like init: U(-1/sqrt(fan_in), 1/sqrt(fan_in)),
    in the original PyTorch layouts."""
    ks = jax.random.split(key, 10)

    def uni(k, shape, fan_in):
        bound = 1.0 / jnp.sqrt(float(fan_in))
        return jax.random.uniform(k, shape, jnp.float32, -bound, bound)

    return {
        "conv1_w": uni(ks[0], (6, 1, 5, 5), 1 * 5 * 5),
        "conv1_b": uni(ks[1], (6,), 1 * 5 * 5),
        "conv2_w": uni(ks[2], (16, 6, 5, 5), 6 * 5 * 5),
        "conv2_b": uni(ks[3], (16,), 6 * 5 * 5),
        "fc1_w": uni(ks[4], (120, 256), 256),
        "fc1_b": uni(ks[5], (120,), 256),
        "fc2_w": uni(ks[6], (84, 120), 120),
        "fc2_b": uni(ks[7], (84,), 120),
        "fc3_w": uni(ks[8], (10, 84), 84),
        "fc3_b": uni(ks[9], (10,), 84),
    }


def prepare_params(raw):
    """One-time transform of PyTorch-layout params into kernel-friendly,
    zero-padded, lane-dense channels-last layouts (done outside the forward
    so there are no per-call transposes)."""
    def pad2(a, rows, cols):
        r, c = a.shape
        return jnp.pad(a, ((0, rows - r), (0, cols - c)))

    def prep_conv(w, b):
        cout, cin, k, _ = w.shape
        K = cin * k * k
        w2 = w.transpose(2, 3, 1, 0).reshape(K, cout)   # (ki,kj,cin) x cout
        return pad2(w2, _round_up(K, 8), LANES), pad2(b.reshape(1, cout), 1, LANES)

    c1w, c1b = prep_conv(raw["conv1_w"], raw["conv1_b"])
    c2w, c2b = prep_conv(raw["conv2_w"], raw["conv2_b"])

    # PyTorch flattens NCHW (c,h,w); our activations flatten NHWC (h,w,c).
    # Permute fc1's columns once so semantics match exactly.
    f1 = raw["fc1_w"].reshape(120, 16, 4, 4).transpose(0, 2, 3, 1).reshape(120, 256)

    return {
        "conv1_w": c1w, "conv1_b": c1b,
        "conv2_w": c2w, "conv2_b": c2b,
        "fc1_w": pad2(f1.T, 256, LANES),
        "fc1_b": pad2(raw["fc1_b"].reshape(1, 120), 1, LANES),
        "fc2_w": pad2(raw["fc2_w"].T, LANES, LANES),
        "fc2_b": pad2(raw["fc2_b"].reshape(1, 84), 1, LANES),
        "fc3_w": pad2(raw["fc3_w"].T, LANES, LANES),
        "fc3_b": pad2(raw["fc3_b"].reshape(1, 10), 1, LANES),
    }


# --------------------------------- forward -----------------------------------

def net_forward(params, x):
    """x: (B, 1, 28, 28) f32 -> logits (B, 10) f32."""
    B = x.shape[0]
    x = jnp.transpose(x, (0, 2, 3, 1))                       # NCHW -> NHWC once
    x = conv_relu_pool(x, params["conv1_w"], params["conv1_b"], k=5, cout=6)
    x = conv_relu_pool(x, params["conv2_w"], params["conv2_b"], k=5, cout=16)
    x = x.reshape(B, 4 * 4 * 16)                             # NHWC flatten
    return fc_stack(x, params["fc1_w"], params["fc1_b"],
                    params["fc2_w"], params["fc2_b"],
                    params["fc3_w"], params["fc3_b"], n_out=10)


# ------------------------- pure-JAX reference (check) -------------------------

def reference_forward(raw, x):
    hi = jax.lax.Precision.HIGHEST

    def conv(x, w, b):
        y = jax.lax.conv_general_dilated(
            x, w, window_strides=(1, 1), padding="VALID",
            dimension_numbers=("NCHW", "OIHW", "NCHW"), precision=hi)
        return jnp.maximum(y + b[None, :, None, None], 0.0)

    def pool(x):
        B, C, H, W = x.shape
        return x.reshape(B, C, H // 2, 2, W // 2, 2).max(axis=(3, 5))

    y = pool(conv(x, raw["conv1_w"], raw["conv1_b"]))
    y = pool(conv(y, raw["conv2_w"], raw["conv2_b"]))
    y = y.reshape(x.shape[0], 16 * 4 * 4)
    y = jnp.maximum(jnp.dot(y, raw["fc1_w"].T, precision=hi) + raw["fc1_b"], 0.0)
    y = jnp.maximum(jnp.dot(y, raw["fc2_w"].T, precision=hi) + raw["fc2_b"], 0.0)
    return jnp.dot(y, raw["fc3_w"].T, precision=hi) + raw["fc3_b"]


if __name__ == "__main__":
    key = jax.random.PRNGKey(0)
    pkey, xkey = jax.random.split(key)
    raw = init_params(pkey)
    params = prepare_params(raw)
    # LeNet forward implies 28x28 single-channel input (so flatten == 16*4*4).
    x = jax.random.normal(xkey, (2, 1, 28, 28), dtype=jnp.float32)

    logits = jax.jit(net_forward)(params, x)
    jax.block_until_ready(logits)
    assert logits.shape == (2, 10) and logits.dtype == jnp.float32

    ref = reference_forward(raw, x)
    assert bool(jnp.allclose(logits, ref, atol=1e-3, rtol=1e-3))
    print("KERNEL_OK")
</pallas_src>

<mosaic_0001>
module attributes {stable_mosaic.version = 11 : i64} {
  func.func @_conv_pool_kernel(%arg0: i32, %arg1: memref<4x288x32xf32, #tpu.memory_space<vmem>>, %arg2: memref<32x128xf32, #tpu.memory_space<vmem>>, %arg3: memref<1x128xf32, #tpu.memory_space<vmem>>, %arg4: memref<288x128xf32, #tpu.memory_space<vmem>>) attributes {dimension_semantics = [#tpu.dimension_semantics<parallel>], iteration_bounds = array<i64: 1>, scalar_prefetch = 0 : i64, scratch_operands = 0 : i64, tpu.core_type = #tpu.core_type<tc>, window_params = [{transform_indices = @transform_0, window_bounds = array<i64: 4, 288, 32>}, {pipeline_mode = #tpu.pipeline_mode<synchronous>, transform_indices = @transform_1, window_bounds = array<i64: 32, 128>}, {pipeline_mode = #tpu.pipeline_mode<synchronous>, transform_indices = @transform_2, window_bounds = array<i64: 1, 128>}, {transform_indices = @transform_3, window_bounds = array<i64: 288, 128>}]} {
    %c0 = arith.constant 0 : index
    %c0_0 = arith.constant 0 : index
    %0 = vector.load %arg2[%c0, %c0_0] : memref<32x128xf32, #tpu.memory_space<vmem>>, vector<32x128xf32>
    %c0_1 = arith.constant 0 : index
    %c0_2 = arith.constant 0 : index
    %c0_3 = arith.constant 0 : index
    %1 = vector.load %arg1[%c0_1, %c0_2, %c0_3] : memref<4x288x32xf32, #tpu.memory_space<vmem>>, vector<1x288x32xf32>
    %2 = vector.shape_cast %1 : vector<1x288x32xf32> to vector<288x32xf32>
    %cst = arith.constant dense<0.000000e+00> : vector<288x128xf32>
    %3 = tpu.matmul %2, %0, %cst {dimension_numbers = #tpu.dot_dimension_numbers<[1], [0], [0], [1], [0, 0, 1, 1], [], []>} : vector<288x32xf32>, vector<32x128xf32>, vector<288x128xf32> -> vector<288x128xf32>
    %c1 = arith.constant 1 : index
    %c0_4 = arith.constant 0 : index
    %c0_5 = arith.constant 0 : index
    %4 = vector.load %arg1[%c1, %c0_4, %c0_5] : memref<4x288x32xf32, #tpu.memory_space<vmem>>, vector<1x288x32xf32>
    %5 = vector.shape_cast %4 : vector<1x288x32xf32> to vector<288x32xf32>
    %cst_6 = arith.constant dense<0.000000e+00> : vector<288x128xf32>
    %6 = tpu.matmul %5, %0, %cst_6 {dimension_numbers = #tpu.dot_dimension_numbers<[1], [0], [0], [1], [0, 0, 1, 1], [], []>} : vector<288x32xf32>, vector<32x128xf32>, vector<288x128xf32> -> vector<288x128xf32>
    %c2 = arith.constant 2 : index
    %c0_7 = arith.constant 0 : index
    %c0_8 = arith.constant 0 : index
    %7 = vector.load %arg1[%c2, %c0_7, %c0_8] : memref<4x288x32xf32, #tpu.memory_space<vmem>>, vector<1x288x32xf32>
    %8 = vector.shape_cast %7 : vector<1x288x32xf32> to vector<288x32xf32>
    %cst_9 = arith.constant dense<0.000000e+00> : vector<288x128xf32>
    %9 = tpu.matmul %8, %0, %cst_9 {dimension_numbers = #tpu.dot_dimension_numbers<[1], [0], [0], [1], [0, 0, 1, 1], [], []>} : vector<288x32xf32>, vector<32x128xf32>, vector<288x128xf32> -> vector<288x128xf32>
    %c3 = arith.constant 3 : index
    %c0_10 = arith.constant 0 : index
    %c0_11 = arith.constant 0 : index
    %10 = vector.load %arg1[%c3, %c0_10, %c0_11] : memref<4x288x32xf32, #tpu.memory_space<vmem>>, vector<1x288x32xf32>
    %11 = vector.shape_cast %10 : vector<1x288x32xf32> to vector<288x32xf32>
    %cst_12 = arith.constant dense<0.000000e+00> : vector<288x128xf32>
    %12 = tpu.matmul %11, %0, %cst_12 {dimension_numbers = #tpu.dot_dimension_numbers<[1], [0], [0], [1], [0, 0, 1, 1], [], []>} : vector<288x32xf32>, vector<32x128xf32>, vector<288x128xf32> -> vector<288x128xf32>
    %13 = arith.maximumf %3, %6 : vector<288x128xf32>
    %14 = arith.maximumf %9, %12 : vector<288x128xf32>
    %15 = arith.maximumf %13, %14 : vector<288x128xf32>
    %c0_13 = arith.constant 0 : index
    %c0_14 = arith.constant 0 : index
    %16 = vector.load %arg3[%c0_13, %c0_14] : memref<1x128xf32, #tpu.memory_space<vmem>>, vector<1x128xf32>
    %17 = vector.broadcast %16 : vector<1x128xf32> to vector<288x128xf32>
    %18 = arith.addf %15, %17 : vector<288x128xf32>
    %cst_15 = arith.constant 0.000000e+00 : f32
    %19 = vector.broadcast %cst_15 : f32 to vector<288x128xf32>
    %20 = arith.maximumf %18, %19 : vector<288x128xf32>
    %c0_16 = arith.constant 0 : index
    %c0_17 = arith.constant 0 : index
    %21 = vector.load %arg4[%c0_16, %c0_17] : memref<288x128xf32, #tpu.memory_space<vmem>>, vector<288x128xf32>
    tpu.vector_store %arg4[%c0_16, %c0_17], %20 {strides = array<i32>} : memref<288x128xf32, #tpu.memory_space<vmem>>, vector<288x128xf32>,
    return
  }
  func.func @transform_0(%arg0: i32) -> (i32, i32, i32) {
    %c0_i32 = arith.constant 0 : i32
    %c0_i32_0 = arith.constant 0 : i32
    %c0_i32_1 = arith.constant 0 : i32
    return %c0_i32, %arg0, %c0_i32_0 : i32, i32, i32
  }
  func.func @transform_1(%arg0: i32) -> (i32, i32) {
    %c0_i32 = arith.constant 0 : i32
    %c0_i32_0 = arith.constant 0 : i32
    %c0_i32_1 = arith.constant 0 : i32
    return %c0_i32, %c0_i32_0 : i32, i32
  }
  func.func @transform_2(%arg0: i32) -> (i32, i32) {
    %c0_i32 = arith.constant 0 : i32
    %c0_i32_0 = arith.constant 0 : i32
    %c0_i32_1 = arith.constant 0 : i32
    return %c0_i32, %c0_i32_0 : i32, i32
  }
  func.func @transform_3(%arg0: i32) -> (i32, i32) {
    %c0_i32 = arith.constant 0 : i32
    %c0_i32_0 = arith.constant 0 : i32
    return %arg0, %c0_i32 : i32, i32
  }
}

module attributes {stable_mosaic.version = 11 : i64} {
  func.func @_conv_pool_kernel(%arg0: i32, %arg1: memref<4x32x152xf32, #tpu.memory_space<vmem>>, %arg2: memref<152x128xf32, #tpu.memory_space<vmem>>, %arg3: memref<1x128xf32, #tpu.memory_space<vmem>>, %arg4: memref<32x128xf32, #tpu.memory_space<vmem>>) attributes {dimension_semantics = [#tpu.dimension_semantics<parallel>], iteration_bounds = array<i64: 1>, scalar_prefetch = 0 : i64, scratch_operands = 0 : i64, tpu.core_type = #tpu.core_type<tc>, window_params = [{transform_indices = @transform_0, window_bounds = array<i64: 4, 32, 152>}, {pipeline_mode = #tpu.pipeline_mode<synchronous>, transform_indices = @transform_1, window_bounds = array<i64: 152, 128>}, {pipeline_mode = #tpu.pipeline_mode<synchronous>, transform_indices = @transform_2, window_bounds = array<i64: 1, 128>}, {transform_indices = @transform_3, window_bounds = array<i64: 32, 128>}]} {
    %c0 = arith.constant 0 : index
    %c0_0 = arith.constant 0 : index
    %0 = vector.load %arg2[%c0, %c0_0] : memref<152x128xf32, #tpu.memory_space<vmem>>, vector<152x128xf32>
    %c0_1 = arith.constant 0 : index
    %c0_2 = arith.constant 0 : index
    %c0_3 = arith.constant 0 : index
    %1 = vector.load %arg1[%c0_1, %c0_2, %c0_3] : memref<4x32x152xf32, #tpu.memory_space<vmem>>, vector<1x32x152xf32>
    %2 = vector.shape_cast %1 : vector<1x32x152xf32> to vector<32x152xf32>
    %cst = arith.constant dense<0.000000e+00> : vector<32x128xf32>
    %3 = tpu.matmul %2, %0, %cst {dimension_numbers = #tpu.dot_dimension_numbers<[1], [0], [0], [1], [0, 0, 1, 1], [], []>} : vector<32x152xf32>, vector<152x128xf32>, vector<32x128xf32> -> vector<32x128xf32>
    %c1 = arith.constant 1 : index
    %c0_4 = arith.constant 0 : index
    %c0_5 = arith.constant 0 : index
    %4 = vector.load %arg1[%c1, %c0_4, %c0_5] : memref<4x32x152xf32, #tpu.memory_space<vmem>>, vector<1x32x152xf32>
    %5 = vector.shape_cast %4 : vector<1x32x152xf32> to vector<32x152xf32>
    %cst_6 = arith.constant dense<0.000000e+00> : vector<32x128xf32>
    %6 = tpu.matmul %5, %0, %cst_6 {dimension_numbers = #tpu.dot_dimension_numbers<[1], [0], [0], [1], [0, 0, 1, 1], [], []>} : vector<32x152xf32>, vector<152x128xf32>, vector<32x128xf32> -> vector<32x128xf32>
    %c2 = arith.constant 2 : index
    %c0_7 = arith.constant 0 : index
    %c0_8 = arith.constant 0 : index
    %7 = vector.load %arg1[%c2, %c0_7, %c0_8] : memref<4x32x152xf32, #tpu.memory_space<vmem>>, vector<1x32x152xf32>
    %8 = vector.shape_cast %7 : vector<1x32x152xf32> to vector<32x152xf32>
    %cst_9 = arith.constant dense<0.000000e+00> : vector<32x128xf32>
    %9 = tpu.matmul %8, %0, %cst_9 {dimension_numbers = #tpu.dot_dimension_numbers<[1], [0], [0], [1], [0, 0, 1, 1], [], []>} : vector<32x152xf32>, vector<152x128xf32>, vector<32x128xf32> -> vector<32x128xf32>
    %c3 = arith.constant 3 : index
    %c0_10 = arith.constant 0 : index
    %c0_11 = arith.constant 0 : index
    %10 = vector.load %arg1[%c3, %c0_10, %c0_11] : memref<4x32x152xf32, #tpu.memory_space<vmem>>, vector<1x32x152xf32>
    %11 = vector.shape_cast %10 : vector<1x32x152xf32> to vector<32x152xf32>
    %cst_12 = arith.constant dense<0.000000e+00> : vector<32x128xf32>
    %12 = tpu.matmul %11, %0, %cst_12 {dimension_numbers = #tpu.dot_dimension_numbers<[1], [0], [0], [1], [0, 0, 1, 1], [], []>} : vector<32x152xf32>, vector<152x128xf32>, vector<32x128xf32> -> vector<32x128xf32>
    %13 = arith.maximumf %3, %6 : vector<32x128xf32>
    %14 = arith.maximumf %9, %12 : vector<32x128xf32>
    %15 = arith.maximumf %13, %14 : vector<32x128xf32>
    %c0_13 = arith.constant 0 : index
    %c0_14 = arith.constant 0 : index
    %16 = vector.load %arg3[%c0_13, %c0_14] : memref<1x128xf32, #tpu.memory_space<vmem>>, vector<1x128xf32>
    %17 = vector.broadcast %16 : vector<1x128xf32> to vector<32x128xf32>
    %18 = arith.addf %15, %17 : vector<32x128xf32>
    %cst_15 = arith.constant 0.000000e+00 : f32
    %19 = vector.broadcast %cst_15 : f32 to vector<32x128xf32>
    %20 = arith.maximumf %18, %19 : vector<32x128xf32>
    %c0_16 = arith.constant 0 : index
    %c0_17 = arith.constant 0 : index
    %21 = vector.load %arg4[%c0_16, %c0_17] : memref<32x128xf32, #tpu.memory_space<vmem>>, vector<32x128xf32>
    tpu.vector_store %arg4[%c0_16, %c0_17], %20 {strides = array<i32>} : memref<32x128xf32, #tpu.memory_space<vmem>>, vector<32x128xf32>,
    return
  }
  func.func @transform_0(%arg0: i32) -> (i32, i32, i32) {
    %c0_i32 = arith.constant 0 : i32
    %c0_i32_0 = arith.constant 0 : i32
    %c0_i32_1 = arith.constant 0 : i32
    return %c0_i32, %arg0, %c0_i32_0 : i32, i32, i32
  }
  func.func @transform_1(%arg0: i32) -> (i32, i32) {
    %c0_i32 = arith.constant 0 : i32
    %c0_i32_0 = arith.constant 0 : i32
    %c0_i32_1 = arith.constant 0 : i32
    return %c0_i32, %c0_i32_0 : i32, i32
  }
  func.func @transform_2(%arg0: i32) -> (i32, i32) {
    %c0_i32 = arith.constant 0 : i32
    %c0_i32_0 = arith.constant 0 : i32
    %c0_i32_1 = arith.constant 0 : i32
    return %c0_i32, %c0_i32_0 : i32, i32
  }
  func.func @transform_3(%arg0: i32) -> (i32, i32) {
    %c0_i32 = arith.constant 0 : i32
    %c0_i32_0 = arith.constant 0 : i32
    return %arg0, %c0_i32 : i32, i32
  }
}

module attributes {stable_mosaic.version = 11 : i64} {
  func.func @_fc_stack_kernel(%arg0: i32, %arg1: memref<8x256xf32, #tpu.memory_space<vmem>>, %arg2: memref<256x128xf32, #tpu.memory_space<vmem>>, %arg3: memref<1x128xf32, #tpu.memory_space<vmem>>, %arg4: memref<128x128xf32, #tpu.memory_space<vmem>>, %arg5: memref<1x128xf32, #tpu.memory_space<vmem>>, %arg6: memref<128x128xf32, #tpu.memory_space<vmem>>, %arg7: memref<1x128xf32, #tpu.memory_space<vmem>>, %arg8: memref<8x128xf32, #tpu.memory_space<vmem>>) attributes {dimension_semantics = [#tpu.dimension_semantics<parallel>], iteration_bounds = array<i64: 1>, scalar_prefetch = 0 : i64, scratch_operands = 0 : i64, tpu.core_type = #tpu.core_type<tc>, window_params = [{transform_indices = @transform_0, window_bounds = array<i64: 8, 256>}, {pipeline_mode = #tpu.pipeline_mode<synchronous>, transform_indices = @transform_1, window_bounds = array<i64: 256, 128>}, {pipeline_mode = #tpu.pipeline_mode<synchronous>, transform_indices = @transform_2, window_bounds = array<i64: 1, 128>}, {pipeline_mode = #tpu.pipeline_mode<synchronous>, transform_indices = @transform_3, window_bounds = array<i64: 128, 128>}, {pipeline_mode = #tpu.pipeline_mode<synchronous>, transform_indices = @transform_4, window_bounds = array<i64: 1, 128>}, {pipeline_mode = #tpu.pipeline_mode<synchronous>, transform_indices = @transform_5, window_bounds = array<i64: 128, 128>}, {pipeline_mode = #tpu.pipeline_mode<synchronous>, transform_indices = @transform_6, window_bounds = array<i64: 1, 128>}, {transform_indices = @transform_7, window_bounds = array<i64: 8, 128>}]} {
    %c0 = arith.constant 0 : index
    %c0_0 = arith.constant 0 : index
    %0 = vector.load %arg1[%c0, %c0_0] : memref<8x256xf32, #tpu.memory_space<vmem>>, vector<8x256xf32>
    %c0_1 = arith.constant 0 : index
    %c0_2 = arith.constant 0 : index
    %1 = vector.load %arg2[%c0_1, %c0_2] : memref<256x128xf32, #tpu.memory_space<vmem>>, vector<256x128xf32>
    %cst = arith.constant dense<0.000000e+00> : vector<8x128xf32>
    %2 = tpu.matmul %0, %1, %cst {dimension_numbers = #tpu.dot_dimension_numbers<[1], [0], [0], [1], [0, 0, 1, 1], [], []>} : vector<8x256xf32>, vector<256x128xf32>, vector<8x128xf32> -> vector<8x128xf32>
    %c0_3 = arith.constant 0 : index
    %c0_4 = arith.constant 0 : index
    %3 = vector.load %arg3[%c0_3, %c0_4] : memref<1x128xf32, #tpu.memory_space<vmem>>, vector<1x128xf32>
    %4 = vector.broadcast %3 : vector<1x128xf32> to vector<8x128xf32>
    %5 = arith.addf %2, %4 : vector<8x128xf32>
    %cst_5 = arith.constant 0.000000e+00 : f32
    %6 = vector.broadcast %cst_5 : f32 to vector<8x128xf32>
    %7 = arith.maximumf %5, %6 : vector<8x128xf32>
    %c0_6 = arith.constant 0 : index
    %c0_7 = arith.constant 0 : index
    %8 = vector.load %arg4[%c0_6, %c0_7] : memref<128x128xf32, #tpu.memory_space<vmem>>, vector<128x128xf32>
    %cst_8 = arith.constant dense<0.000000e+00> : vector<8x128xf32>
    %9 = tpu.matmul %7, %8, %cst_8 {dimension_numbers = #tpu.dot_dimension_numbers<[1], [0], [0], [1], [0, 0, 1, 1], [], []>} : vector<8x128xf32>, vector<128x128xf32>, vector<8x128xf32> -> vector<8x128xf32>
    %c0_9 = arith.constant 0 : index
    %c0_10 = arith.constant 0 : index
    %10 = vector.load %arg5[%c0_9, %c0_10] : memref<1x128xf32, #tpu.memory_space<vmem>>, vector<1x128xf32>
    %11 = vector.broadcast %10 : vector<1x128xf32> to vector<8x128xf32>
    %12 = arith.addf %9, %11 : vector<8x128xf32>
    %cst_11 = arith.constant 0.000000e+00 : f32
    %13 = vector.broadcast %cst_11 : f32 to vector<8x128xf32>
    %14 = arith.maximumf %12, %13 : vector<8x128xf32>
    %c0_12 = arith.constant 0 : index
    %c0_13 = arith.constant 0 : index
    %15 = vector.load %arg6[%c0_12, %c0_13] : memref<128x128xf32, #tpu.memory_space<vmem>>, vector<128x128xf32>
    %cst_14 = arith.constant dense<0.000000e+00> : vector<8x128xf32>
    %16 = tpu.matmul %14, %15, %cst_14 {dimension_numbers = #tpu.dot_dimension_numbers<[1], [0], [0], [1], [0, 0, 1, 1], [], []>} : vector<8x128xf32>, vector<128x128xf32>, vector<8x128xf32> -> vector<8x128xf32>
    %c0_15 = arith.constant 0 : index
    %c0_16 = arith.constant 0 : index
    %17 = vector.load %arg7[%c0_15, %c0_16] : memref<1x128xf32, #tpu.memory_space<vmem>>, vector<1x128xf32>
    %18 = vector.broadcast %17 : vector<1x128xf32> to vector<8x128xf32>
    %19 = arith.addf %16, %18 : vector<8x128xf32>
    %c0_17 = arith.constant 0 : index
    %c0_18 = arith.constant 0 : index
    %20 = vector.load %arg8[%c0_17, %c0_18] : memref<8x128xf32, #tpu.memory_space<vmem>>, vector<8x128xf32>
    tpu.vector_store %arg8[%c0_17, %c0_18], %19 {strides = array<i32>} : memref<8x128xf32, #tpu.memory_space<vmem>>, vector<8x128xf32>,
    return
  }
  func.func @transform_0(%arg0: i32) -> (i32, i32) {
    %c0_i32 = arith.constant 0 : i32
    %c0_i32_0 = arith.constant 0 : i32
    return %arg0, %c0_i32 : i32, i32
  }
  func.func @transform_1(%arg0: i32) -> (i32, i32) {
    %c0_i32 = arith.constant 0 : i32
    %c0_i32_0 = arith.constant 0 : i32
    %c0_i32_1 = arith.constant 0 : i32
    return %c0_i32, %c0_i32_0 : i32, i32
  }
  func.func @transform_2(%arg0: i32) -> (i32, i32) {
    %c0_i32 = arith.constant 0 : i32
    %c0_i32_0 = arith.constant 0 : i32
    %c0_i32_1 = arith.constant 0 : i32
    return %c0_i32, %c0_i32_0 : i32, i32
  }
  func.func @transform_3(%arg0: i32) -> (i32, i32) {
    %c0_i32 = arith.constant 0 : i32
    %c0_i32_0 = arith.constant 0 : i32
    %c0_i32_1 = arith.constant 0 : i32
    return %c0_i32, %c0_i32_0 : i32, i32
  }
  func.func @transform_4(%arg0: i32) -> (i32, i32) {
    %c0_i32 = arith.constant 0 : i32
    %c0_i32_0 = arith.constant 0 : i32
    %c0_i32_1 = arith.constant 0 : i32
    return %c0_i32, %c0_i32_0 : i32, i32
  }
  func.func @transform_5(%arg0: i32) -> (i32, i32) {
    %c0_i32 = arith.constant 0 : i32
    %c0_i32_0 = arith.constant 0 : i32
    %c0_i32_1 = arith.constant 0 : i32
    return %c0_i32, %c0_i32_0 : i32, i32
  }
  func.func @transform_6(%arg0: i32) -> (i32, i32) {
    %c0_i32 = arith.constant 0 : i32
    %c0_i32_0 = arith.constant 0 : i32
    %c0_i32_1 = arith.constant 0 : i32
    return %c0_i32, %c0_i32_0 : i32, i32
  }
  func.func @transform_7(%arg0: i32) -> (i32, i32) {
    %c0_i32 = arith.constant 0 : i32
    %c0_i32_0 = arith.constant 0 : i32
    return %arg0, %c0_i32 : i32, i32
  }
}

</mosaic_0001>

<llo_original>
// kernel: net_forward.3
$region0: #{net_forward.3}
  #allocation0 [shape = 'u32[]', space=smem, size = 0x4, offset = 0x4, fixed_abs, tag = 'smem constant byte address 0x4 - core index']
  #allocation1 [shape = 'u32[144,128]{1,0:T(1,128)}', space=vmem, size = 0x12000, scoped, tag = 'internal scratch']
  %s0 = inlined_call_operand.vmem [shape: f32[4,288,32], index: 0, kind: input, shape index: {}]
  %s1 = inlined_call_operand.vmem [shape: f32[32,128], index: 1, kind: input, shape index: {}]
  %s2 = inlined_call_operand.vmem [shape: f32[1,128], index: 2, kind: input, shape index: {}]
  %s3 = inlined_call_operand.vmem [shape: f32[288,128], index: 3, kind: output, shape index: {}]
  %s4 = sld [smem:[#allocation0]]
  $region22: #{net_forward.3} parent=0
    _
  %s6 = ssub.s32 1, %s4
  %s7 = scalar_select 0, %s6, %s4
  // Predicated region
  $region2: #{net_forward.3} parent=0 // pred_check
    _
  $region3: #{net_forward.3} parent=0 // pred_check_branch
    %9 = sbr.rel (0) target = $region5
  $region4: #{net_forward.3} parent=0 // pred_region
    _
  $region5: #{net_forward.3} parent=0 // pred_fallthru
    _
  // Predicated region
  $region6: #{net_forward.3} parent=0 // pred_check
    _
  $region7: #{net_forward.3} parent=0 // pred_check_branch
    %11 = sbr.rel (0) target = $region9
  $region8: #{net_forward.3} parent=0 // pred_region
    _
  $region9: #{net_forward.3} parent=0 // pred_fallthru
    _
  // Predicated region
  $region10: #{net_forward.3} parent=0 // pred_check
    _
  $region11: #{net_forward.3} parent=0 // pred_check_branch
    %13 = sbr.rel (0) target = $region13
  $region12: #{net_forward.3} parent=0 // pred_region
    _
  $region13: #{net_forward.3} parent=0 // pred_fallthru
    _
  %v14 = vld [vmem:[%s1] sm:$0xff]
  %v15 = vld [vmem:[%s1 + $0x8] sm:$0xff]
  %v16 = vld [vmem:[%s1 + $0x10] sm:$0xff]
  %v17 = vld [vmem:[%s1 + $0x18] sm:$0xff]
  %v18 = vld [vmem:[%s0] sm:$0xff]
  %v19 = vld [vmem:[%s0 + $0x8] sm:$0xff]
  %v20 = vld [vmem:[%s0 + $0x10] sm:$0xff]
  %v21 = vld [vmem:[%s0 + $0x18] sm:$0xff]
  %v22 = vld [vmem:[%s0 + $0x20] sm:$0xff]
  %v23 = vld [vmem:[%s0 + $0x28] sm:$0xff]
  %v24 = vld [vmem:[%s0 + $0x30] sm:$0xff]
  %v25 = vld [vmem:[%s0 + $0x38] sm:$0xff]
  %v26 = vld [vmem:[%s0 + $0x40] sm:$0xff]
  %v27 = vld [vmem:[%s0 + $0x48] sm:$0xff]
  %v28 = vld [vmem:[%s0 + $0x50] sm:$0xff]
  %v29 = vld [vmem:[%s0 + $0x58] sm:$0xff]
  %v30 = vld [vmem:[%s0 + $0x60] sm:$0xff]
  %v31 = vld [vmem:[%s0 + $0x68] sm:$0xff]
  %v32 = vld [vmem:[%s0 + $0x70] sm:$0xff]
  %v33 = vld [vmem:[%s0 + $0x78] sm:$0xff]
  %v34 = vld [vmem:[%s0 + $0x80] sm:$0xff]
  %v35 = vld [vmem:[%s0 + $0x88] sm:$0xff]
  %v36 = vld [vmem:[%s0 + $0x90] sm:$0xff]
  %v37 = vld [vmem:[%s0 + $0x98] sm:$0xff]
  %v38 = vld [vmem:[%s0 + $0xa0] sm:$0xff]
  %v39 = vld [vmem:[%s0 + $0xa8] sm:$0xff]
  %v40 = vld [vmem:[%s0 + $0xb0] sm:$0xff]
  %v41 = vld [vmem:[%s0 + $0xb8] sm:$0xff]
  %v42 = vld [vmem:[%s0 + $0xc0] sm:$0xff]
  %v43 = vld [vmem:[%s0 + $0xc8] sm:$0xff]
  %v44 = vld [vmem:[%s0 + $0xd0] sm:$0xff]
  %v45 = vld [vmem:[%s0 + $0xd8] sm:$0xff]
  %v46 = vld [vmem:[%s0 + $0xe0] sm:$0xff]
  %v47 = vld [vmem:[%s0 + $0xe8] sm:$0xff]
  %v48 = vld [vmem:[%s0 + $0xf0] sm:$0xff]
  %v49 = vld [vmem:[%s0 + $0xf8] sm:$0xff]
  %v50 = vld [vmem:[%s0 + $0x100] sm:$0xff]
  %v51 = vld [vmem:[%s0 + $0x108] sm:$0xff]
  %v52 = vld [vmem:[%s0 + $0x110] sm:$0xff]
  %v53 = vld [vmem:[%s0 + $0x118] sm:$0xff]
  %vm54 = vcmask 261120
  %v56 = vsel %vm54, %v18, 0
  %v59 = vsel %vm54, %v19, 0
  %v62 = vsel %vm54, %v20, 0
  %v65 = vsel %vm54, %v21, 0
  %v68 = vsel %vm54, %v22, 0
  %v71 = vsel %vm54, %v23, 0
  %v74 = vsel %vm54, %v24, 0
  %v77 = vsel %vm54, %v25, 0
  %v80 = vsel %vm54, %v26, 0
  %v83 = vsel %vm54, %v27, 0
  %v86 = vsel %vm54, %v28, 0
  %v89 = vsel %vm54, %v29, 0
  %v92 = vsel %vm54, %v30, 0
  %v95 = vsel %vm54, %v31, 0
  %v98 = vsel %vm54, %v32, 0
  %v101 = vsel %vm54, %v33, 0
  %v104 = vsel %vm54, %v34, 0
  %v107 = vsel %vm54, %v35, 0
  %v110 = vsel %vm54, %v36, 0
  %v113 = vsel %vm54, %v37, 0
  %v116 = vsel %vm54, %v38, 0
  %v119 = vsel %vm54, %v39, 0
  %v122 = vsel %vm54, %v40, 0
  %v125 = vsel %vm54, %v41, 0
  %v128 = vsel %vm54, %v42, 0
  %v131 = vsel %vm54, %v43, 0
  %v134 = vsel %vm54, %v44, 0
  %v137 = vsel %vm54, %v45, 0
  %v140 = vsel %vm54, %v46, 0
  %v143 = vsel %vm54, %v47, 0
  %v146 = vsel %vm54, %v48, 0
  %v149 = vsel %vm54, %v49, 0
  %v152 = vsel %vm54, %v50, 0
  %v155 = vsel %vm54, %v51, 0
  %v158 = vsel %vm54, %v52, 0
  %v161 = vsel %vm54, %v53, 0
  %163 = vmatprep.subr.mxu0 0.0
  %164 = vmatpush1.msra.mxu0 %v14
  %165 = vmatprep.subr.mxu0 0.0
  %166 = vmatpush1.msra.mxu0 %v15
  %167 = vmatprep.subr.mxu0 0.0
  %168 = vmatpush1.msra.mxu0 %v16
  %169 = vmatprep.subr.mxu0 0.0
  %170 = vmatpush1.msra.mxu0 %v17
  %171 = vmatprep.subr.mxu0 0.0
  %172 = vmatpush1.msra.mxu0 0.0
  %173 = vmatprep.subr.mxu0 0.0
  %174 = vmatpush1.msra.mxu0 0.0
  %175 = vmatprep.subr.mxu0 0.0
  %176 = vmatpush1.msra.mxu0 0.0
  %177 = vmatprep.subr.mxu0 0.0
  %178 = vmatpush1.msra.mxu0 0.0
  %179 = vmatprep.subr.mxu0 0.0
  %180 = vmatpush1.msra.mxu0 0.0
  %181 = vmatprep.subr.mxu0 0.0
  %182 = vmatpush1.msra.mxu0 0.0
  %183 = vmatprep.subr.mxu0 0.0
  %184 = vmatpush1.msra.mxu0 0.0
  %185 = vmatprep.subr.mxu0 0.0
  %186 = vmatpush1.msra.mxu0 0.0
  %187 = vmatprep.subr.mxu0 0.0
  %188 = vmatpush1.msra.mxu0 0.0
  %189 = vmatprep.subr.mxu0 0.0
  %190 = vmatpush1.msra.mxu0 0.0
  %191 = vmatprep.subr.mxu0 0.0
  %192 = vmatpush1.msra.mxu0 0.0
  %193 = vmatprep.subr.mxu0 0.0
  %194 = vmatpush1.msra.mxu0 0.0
  %195 = vmatprep.subr.mxu0 0.0
  %196 = vmatpush1.msra.mxu0 0.0
  %197 = vmatprep.subr.mxu0 0.0
  %198 = vmatpush1.msra.mxu0 0.0
  %199 = vmatprep.subr.mxu0 0.0
  %200 = vmatpush1.msra.mxu0 0.0
  %201 = vmatprep.subr.mxu0 0.0
  %202 = vmatpush1.msra.mxu0 0.0
  %203 = vmatprep.subr.mxu0 0.0
  %204 = vmatpush1.msra.mxu0 0.0
  %205 = vmatprep.subr.mxu0 0.0
  %206 = vmatpush1.msra.mxu0 0.0
  %207 = vmatprep.subr.mxu0 0.0
  %208 = vmatpush1.msra.mxu0 0.0
  %209 = vmatprep.subr.mxu0 0.0
  %210 = vmatpush1.msra.mxu0 0.0
  %211 = vmatprep.subr.mxu0 0.0
  %212 = vmatpush1.msra.mxu0 0.0
  %213 = vmatprep.subr.mxu0 0.0
  %214 = vmatpush1.msra.mxu0 0.0
  %215 = vmatprep.subr.mxu0 0.0
  %216 = vmatpush1.msra.mxu0 0.0
  %217 = vmatprep.subr.mxu0 0.0
  %218 = vmatpush1.msra.mxu0 0.0
  %219 = vmatprep.subr.mxu0 0.0
  %220 = vmatpush1.msra.mxu0 0.0
  %221 = vmatprep.subr.mxu0 0.0
  %222 = vmatpush1.msra.mxu0 0.0
  %223 = vmatprep.subr.mxu0 0.0
  %224 = vmatpush1.msra.mxu0 0.0
  %225 = vmatprep.subr.mxu0 0.0
  %226 = vmatpush1.msra.mxu0 0.0
  %227 = vmatprep.mubr.f32.mxu0 0.0
  %228 = vmatmul.mubr.f32.gmra.mrb[0].mxu0 %v56
  %v229 = vpop.f32.mrb[0].mxu0
  %v230 = vadd.f32 0.0, %v229
  %v231 = vpop.f32.mrb[0].mxu0
  %232 = vmatprep.mubr.f32.mxu0 0.0
  %233 = vmatmul.mubr.f32.gmra.mrb[0].mxu0 %v59
  %v234 = vpop.f32.mrb[0].mxu0
  %v235 = vadd.f32 0.0, %v234
  %v236 = vpop.f32.mrb[0].mxu0
  %237 = vmatprep.mubr.f32.mxu0 0.0
  %238 = vmatmul.mubr.f32.gmra.mrb[0].mxu0 %v62
  %v239 = vpop.f32.mrb[0].mxu0
  %v240 = vadd.f32 0.0, %v239
  %v241 = vpop.f32.mrb[0].mxu0
  %242 = vmatprep.mubr.f32.mxu0 0.0
  %243 = vmatmul.mubr.f32.gmra.mrb[0].mxu0 %v65
  %v244 = vpop.f32.mrb[0].mxu0
  %v245 = vadd.f32 0.0, %v244
  %v246 = vpop.f32.mrb[0].mxu0
  %247 = vmatprep.mubr.f32.mxu0 0.0
  %248 = vmatmul.mubr.f32.gmra.mrb[0].mxu0 %v68
  %v249 = vpop.f32.mrb[0].mxu0
  %v250 = vadd.f32 0.0, %v249
  %v251 = vpop.f32.mrb[0].mxu0
  %252 = vmatprep.mubr.f32.mxu0 0.0
  %253 = vmatmul.mubr.f32.gmra.mrb[0].mxu0 %v71
  %v254 = vpop.f32.mrb[0].mxu0
  %v255 = vadd.f32 0.0, %v254
  %v256 = vpop.f32.mrb[0].mxu0
  %257 = vmatprep.mubr.f32.mxu0 0.0
  %258 = vmatmul.mubr.f32.gmra.mrb[0].mxu0 %v74
  %v259 = vpop.f32.mrb[0].mxu0
  %v260 = vadd.f32 0.0, %v259
  %v261 = vpop.f32.mrb[0].mxu0
  %262 = vmatprep.mubr.f32.mxu0 0.0
  %263 = vmatmul.mubr.f32.gmra.mrb[0].mxu0 %v77
  %v264 = vpop.f32.mrb[0].mxu0
  %v265 = vadd.f32 0.0, %v264
  %v266 = vpop.f32.mrb[0].mxu0
  %267 = vmatprep.mubr.f32.mxu0 0.0
  %268 = vmatmul.mubr.f32.gmra.mrb[0].mxu0 %v80
  %v269 = vpop.f32.mrb[0].mxu0
  %v270 = vadd.f32 0.0, %v269
  %v271 = vpop.f32.mrb[0].mxu0
  %272 = vmatprep.mubr.f32.mxu0 0.0
  %273 = vmatmul.mubr.f32.gmra.mrb[0].mxu0 %v83
  %v274 = vpop.f32.mrb[0].mxu0
  %v275 = vadd.f32 0.0, %v274
  %v276 = vpop.f32.mrb[0].mxu0
  %277 = vmatprep.mubr.f32.mxu0 0.0
  %278 = vmatmul.mubr.f32.gmra.mrb[0].mxu0 %v86
  %v279 = vpop.f32.mrb[0].mxu0
  %v280 = vadd.f32 0.0, %v279
  %v281 = vpop.f32.mrb[0].mxu0
  %282 = vmatprep.mubr.f32.mxu0 0.0
  %283 = vmatmul.mubr.f32.gmra.mrb[0].mxu0 %v89
  %v284 = vpop.f32.mrb[0].mxu0
  %v285 = vadd.f32 0.0, %v284
  %v286 = vpop.f32.mrb[0].mxu0
  %287 = vmatprep.mubr.f32.mxu0 0.0
  %288 = vmatmul.mubr.f32.gmra.mrb[0].mxu0 %v92
  %v289 = vpop.f32.mrb[0].mxu0
  %v290 = vadd.f32 0.0, %v289
  %v291 = vpop.f32.mrb[0].mxu0
  %292 = vmatprep.mubr.f32.mxu0 0.0
  %293 = vmatmul.mubr.f32.gmra.mrb[0].mxu0 %v95
  %v294 = vpop.f32.mrb[0].mxu0
  %v295 = vadd.f32 0.0, %v294
  %v296 = vpop.f32.mrb[0].mxu0
  %297 = vmatprep.mubr.f32.mxu0 0.0
  %298 = vmatmul.mubr.f32.gmra.mrb[0].mxu0 %v98
  %v299 = vpop.f32.mrb[0].mxu0
  %v300 = vadd.f32 0.0, %v299
  %v301 = vpop.f32.mrb[0].mxu0
  %302 = vmatprep.mubr.f32.mxu0 0.0
  %303 = vmatmul.mubr.f32.gmra.mrb[0].mxu0 %v101
  %v304 = vpop.f32.mrb[0].mxu0
  %v305 = vadd.f32 0.0, %v304
  %v306 = vpop.f32.mrb[0].mxu0
  %307 = vmatprep.mubr.f32.mxu0 0.0
  %308 = vmatmul.mubr.f32.gmra.mrb[0].mxu0 %v104
  %v309 = vpop.f32.mrb[0].mxu0
  %v310 = vadd.f32 0.0, %v309
  %v311 = vpop.f32.mrb[0].mxu0
  %312 = vmatprep.mubr.f32.mxu0 0.0
  %313 = vmatmul.mubr.f32.gmra.mrb[0].mxu0 %v107
  %v314 = vpop.f32.mrb[0].mxu0
  %v315 = vadd.f32 0.0, %v314
  %v316 = vpop.f32.mrb[0].mxu0
  %317 = vmatprep.mubr.f32.mxu0 0.0
  %318 = vmatmul.mubr.f32.gmra.mrb[0].mxu0 %v110
  %v319 = vpop.f32.mrb[0].mxu0
  %v320 = vadd.f32 0.0, %v319
  %v321 = vpop.f32.mrb[0].mxu0
  %322 = vmatprep.mubr.f32.mxu0 0.0
  %323 = vmatmul.mubr.f32.gmra.mrb[0].mxu0 %v113
  %v324 = vpop.f32.mrb[0].mxu0
  %v325 = vadd.f32 0.0, %v324
  %v326 = vpop.f32.mrb[0].mxu0
  %327 = vmatprep.mubr.f32.mxu0 0.0
  %328 = vmatmul.mubr.f32.gmra.mrb[0].mxu0 %v116
  %v329 = vpop.f32.mrb[0].mxu0
  %v330 = vadd.f32 0.0, %v329
  %v331 = vpop.f32.mrb[0].mxu0
  %332 = vmatprep.mubr.f32.mxu0 0.0
  %333 = vmatmul.mubr.f32.gmra.mrb[0].mxu0 %v119
  %v334 = vpop.f32.mrb[0].mxu0
  %v335 = vadd.f32 0.0, %v334
  %v336 = vpop.f32.mrb[0].mxu0
  %337 = vmatprep.mubr.f32.mxu0 0.0
  %338 = vmatmul.mubr.f32.gmra.mrb[0].mxu0 %v122
  %v339 = vpop.f32.mrb[0].mxu0
  %v340 = vadd.f32 0.0, %v339
  %v341 = vpop.f32.mrb[0].mxu0
  %342 = vmatprep.mubr.f32.mxu0 0.0
  %343 = vmatmul.mubr.f32.gmra.mrb[0].mxu0 %v125
  %v344 = vpop.f32.mrb[0].mxu0
  %v345 = vadd.f32 0.0, %v344
  %v346 = vpop.f32.mrb[0].mxu0
  %347 = vmatprep.mubr.f32.mxu0 0.0
  %348 = vmatmul.mubr.f32.gmra.mrb[0].mxu0 %v128
  %v349 = vpop.f32.mrb[0].mxu0
  %v350 = vadd.f32 0.0, %v349
  %v351 = vpop.f32.mrb[0].mxu0
  %352 = vmatprep.mubr.f32.mxu0 0.0
  %353 = vmatmul.mubr.f32.gmra.mrb[0].mxu0 %v131
  %v354 = vpop.f32.mrb[0].mxu0
  %v355 = vadd.f32 0.0, %v354
  %v356 = vpop.f32.mrb[0].mxu0
  %357 = vmatprep.mubr.f32.mxu0 0.0
  %358 = vmatmul.mubr.f32.gmra.mrb[0].mxu0 %v134
  %v359 = vpop.f32.mrb[0].mxu0
  %v360 = vadd.f32 0.0, %v359
  %v361 = vpop.f32.mrb[0].mxu0
  %362 = vmatprep.mubr.f32.mxu0 0.0
  %363 = vmatmul.mubr.f32.gmra.mrb[0].mxu0 %v137
  %v364 = vpop.f32.mrb[0].mxu0
  %v365 = vadd.f32 0.0, %v364
  %v366 = vpop.f32.mrb[0].mxu0
  %367 = vmatprep.mubr.f32.mxu0 0.0
  %368 = vmatmul.mubr.f32.gmra.mrb[0].mxu0 %v140
  %v369 = vpop.f32.mrb[0].mxu0
  %v370 = vadd.f32 0.0, %v369
  %v371 = vpop.f32.mrb[0].mxu0
  %372 = vmatprep.mubr.f32.mxu0 0.0
  %373 = vmatmul.mubr.f32.gmra.mrb[0].mxu0 %v143
  %v374 = vpop.f32.mrb[0].mxu0
  %v375 = vadd.f32 0.0, %v374
  %v376 = vpop.f32.mrb[0].mxu0
  %377 = vmatprep.mubr.f32.mxu0 0.0
  %378 = vmatmul.mubr.f32.gmra.mrb[0].mxu0 %v146
  %v379 = vpop.f32.mrb[0].mxu0
  %v380 = vadd.f32 0.0, %v379
  %v381 = vpop.f32.mrb[0].mxu0
  %382 = vmatprep.mubr.f32.mxu0 0.0
  %383 = vmatmul.mubr.f32.gmra.mrb[0].mxu0 %v149
  %v384 = vpop.f32.mrb[0].mxu0
  %v385 = vadd.f32 0.0, %v384
  %v386 = vpop.f32.mrb[0].mxu0
  %387 = vmatprep.mubr.f32.mxu0 0.0
  %388 = vmatmul.mubr.f32.gmra.mrb[0].mxu0 %v152
  %v389 = vpop.f32.mrb[0].mxu0
  %v390 = vadd.f32 0.0, %v389
  %v391 = vpop.f32.mrb[0].mxu0
  %392 = vmatprep.mubr.f32.mxu0 0.0
  %393 = vmatmul.mubr.f32.gmra.mrb[0].mxu0 %v155
  %v394 = vpop.f32.mrb[0].mxu0
  %v395 = vadd.f32 0.0, %v394
  %v396 = vpop.f32.mrb[0].mxu0
  %397 = vmatprep.mubr.f32.mxu0 0.0
  %398 = vmatmul.mubr.f32.gmra.mrb[0].mxu0 %v158
  %v399 = vpop.f32.mrb[0].mxu0
  %v400 = vadd.f32 0.0, %v399
  %v401 = vpop.f32.mrb[0].mxu0
  %402 = vmatprep.mubr.f32.mxu0 0.0
  %403 = vmatmul.mubr.f32.gmra.mrb[0].mxu0 %v161
  %v404 = vpop.f32.mrb[0].mxu0
  %v405 = vadd.f32 0.0, %v404
  %v406 = vpop.f32.mrb[0].mxu0
  %407 = vdwg.mxu0
  %s408 = scalar_lea.vmem %s0, 288
  %v409 = vld [vmem:[%s408] sm:$0xff]
  %v410 = vld [vmem:[%s408 + $0x8] sm:$0xff]
  %v411 = vld [vmem:[%s408 + $0x10] sm:$0xff]
  %v412 = vld [vmem:[%s408 + $0x18] sm:$0xff]
  %v413 = vld [vmem:[%s408 + $0x20] sm:$0xff]
  %v414 = vld [vmem:[%s408 + $0x28] sm:$0xff]
  %v415 = vld [vmem:[%s408 + $0x30] sm:$0xff]
  %v416 = vld [vmem:[%s408 + $0x38] sm:$0xff]
  %v417 = vld [vmem:[%s408 + $0x40] sm:$0xff]
  %v418 = vld [vmem:[%s408 + $0x48] sm:$0xff]
  %v419 = vld [vmem:[%s408 + $0x50] sm:$0xff]
  %v420 = vld [vmem:[%s408 + $0x58] sm:$0xff]
  %v421 = vld [vmem:[%s408 + $0x60] sm:$0xff]
  %v422 = vld [vmem:[%s408 + $0x68] sm:$0xff]
  %v423 = vld [vmem:[%s408 + $0x70] sm:$0xff]
  %v424 = vld [vmem:[%s408 + $0x78] sm:$0xff]
  %v425 = vld [vmem:[%s408 + $0x80] sm:$0xff]
  %v426 = vld [vmem:[%s408 + $0x88] sm:$0xff]
  %v427 = vld [vmem:[%s408 + $0x90] sm:$0xff]
  %v428 = vld [vmem:[%s408 + $0x98] sm:$0xff]
  %v429 = vld [vmem:[%s408 + $0xa0] sm:$0xff]
  %v430 = vld [vmem:[%s408 + $0xa8] sm:$0xff]
  %v431 = vld [vmem:[%s408 + $0xb0] sm:$0xff]
  %v432 = vld [vmem:[%s408 + $0xb8] sm:$0xff]
  %v433 = vld [vmem:[%s408 + $0xc0] sm:$0xff]
  %v434 = vld [vmem:[%s408 + $0xc8] sm:$0xff]
  %v435 = vld [vmem:[%s408 + $0xd0] sm:$0xff]
  %v436 = vld [vmem:[%s408 + $0xd8] sm:$0xff]
  %v437 = vld [vmem:[%s408 + $0xe0] sm:$0xff]
  %v438 = vld [vmem:[%s408 + $0xe8] sm:$0xff]
  %v439 = vld [vmem:[%s408 + $0xf0] sm:$0xff]
  %v440 = vld [vmem:[%s408 + $0xf8] sm:$0xff]
  %v441 = vld [vmem:[%s408 + $0x100] sm:$0xff]
  %v442 = vld [vmem:[%s408 + $0x108] sm:$0xff]
  %v443 = vld [vmem:[%s408 + $0x110] sm:$0xff]
  %v444 = vld [vmem:[%s408 + $0x118] sm:$0xff]
  %v446 = vsel %vm54, %v409, 0
  %v449 = vsel %vm54, %v410, 0
  %v452 = vsel %vm54, %v411, 0
  %v455 = vsel %vm54, %v412, 0
  %v458 = vsel %vm54, %v413, 0
  %v461 = vsel %vm54, %v414, 0
  %v464 = vsel %vm54, %v415, 0
  %v467 = vsel %vm54, %v416, 0
  %v470 = vsel %vm54, %v417, 0
  %v473 = vsel %vm54, %v418, 0
  %v476 = vsel %vm54, %v419, 0
  %v479 = vsel %vm54, %v420, 0
  %v482 = vsel %vm54, %v421, 0
  %v485 = vsel %vm54, %v422, 0
  %v488 = vsel %vm54, %v423, 0
  %v491 = vsel %vm54, %v424, 0
  %v494 = vsel %vm54, %v425, 0
  %v497 = vsel %vm54, %v426, 0
  %v500 = vsel %vm54, %v427, 0
  %v503 = vsel %vm54, %v428, 0
  %v506 = vsel %vm54, %v429, 0
  %v509 = vsel %vm54, %v430, 0
  %v512 = vsel %vm54, %v431, 0
  %v515 = vsel %vm54, %v432, 0
  %v518 = vsel %vm54, %v433, 0
  %v521 = vsel %vm54, %v434, 0
  %v524 = vsel %vm54, %v435, 0
  %v527 = vsel %vm54, %v436, 0
  %v530 = vsel %vm54, %v437, 0
  %v533 = vsel %vm54, %v438, 0
  %v536 = vsel %vm54, %v439, 0
  %v539 = vsel %vm54, %v440, 0
  %v542 = vsel %vm54, %v441, 0
  %v545 = vsel %vm54, %v442, 0
  %v548 = vsel %vm54, %v443, 0
  %v551 = vsel %vm54, %v444, 0
  %553 = vmatprep.subr.mxu0 0.0
  %554 = vmatpush1.msra.mxu0 %v14
  %555 = vmatprep.subr.mxu0 0.0
  %556 = vmatpush1.msra.mxu0 %v15
  %557 = vmatprep.subr.mxu0 0.0
  %558 = vmatpush1.msra.mxu0 %v16
  %559 = vmatprep.subr.mxu0 0.0
  %560 = vmatpush1.msra.mxu0 %v17
  %561 = vmatprep.subr.mxu0 0.0
  %562 = vmatpush1.msra.mxu0 0.0
  %563 = vmatprep.subr.mxu0 0.0
  %564 = vmatpush1.msra.mxu0 0.0
  %565 = vmatprep.subr.mxu0 0.0
  %566 = vmatpush1.msra.mxu0 0.0
  %567 = vmatprep.subr.mxu0 0.0
  %568 = vmatpush1.msra.mxu0 0.0
  %569 = vmatprep.subr.mxu0 0.0
  %570 = vmatpush1.msra.mxu0 0.0
  %571 = vmatprep.subr.mxu0 0.0
  %572 = vmatpush1.msra.mxu0 0.0
  %573 = vmatprep.subr.mxu0 0.0
  %574 = vmatpush1.msra.mxu0 0.0
  %575 = vmatprep.subr.mxu0 0.0
  %576 = vmatpush1.msra.mxu0 0.0
  %577 = vmatprep.subr.mxu0 0.0
  %578 = vmatpush1.msra.mxu0 0.0
  %579 = vmatprep.subr.mxu0 0.0
  %580 = vmatpush1.msra.mxu0 0.0
  %581 = vmatprep.subr.mxu0 0.0
  %582 = vmatpush1.msra.mxu0 0.0
  %583 = vmatprep.subr.mxu0 0.0
  %584 = vmatpush1.msra.mxu0 0.0
  %585 = vmatprep.subr.mxu0 0.0
  %586 = vmatpush1.msra.mxu0 0.0
  %587 = vmatprep.subr.mxu0 0.0
  %588 = vmatpush1.msra.mxu0 0.0
  %589 = vmatprep.subr.mxu0 0.0
  %590 = vmatpush1.msra.mxu0 0.0
  %591 = vmatprep.subr.mxu0 0.0
  %592 = vmatpush1.msra.mxu0 0.0
  %593 = vmatprep.subr.mxu0 0.0
  %594 = vmatpush1.msra.mxu0 0.0
  %595 = vmatprep.subr.mxu0 0.0
  %596 = vmatpush1.msra.mxu0 0.0
  %597 = vmatprep.subr.mxu0 0.0
  %598 = vmatpush1.msra.mxu0 0.0
  %599 = vmatprep.subr.mxu0 0.0
  %600 = vmatpush1.msra.mxu0 0.0
  %601 = vmatprep.subr.mxu0 0.0
  %602 = vmatpush1.msra.mxu0 0.0
  %603 = vmatprep.subr.mxu0 0.0
  %604 = vmatpush1.msra.mxu0 0.0
  %605 = vmatprep.subr.mxu0 0.0
  %606 = vmatpush1.msra.mxu0 0.0
  %607 = vmatprep.subr.mxu0 0.0
  %608 = vmatpush1.msra.mxu0 0.0
  %609 = vmatprep.subr.mxu0 0.0
  %610 = vmatpush1.msra.mxu0 0.0
  %611 = vmatprep.subr.mxu0 0.0
  %612 = vmatpush1.msra.mxu0 0.0
  %613 = vmatprep.subr.mxu0 0.0
  %614 = vmatpush1.msra.mxu0 0.0
  %615 = vmatprep.subr.mxu0 0.0
  %616 = vmatpush1.msra.mxu0 0.0
  %617 = vmatprep.mubr.f32.mxu0 0.0
  %618 = vmatmul.mubr.f32.gmra.mrb[0].mxu0 %v446
  %v619 = vpop.f32.mrb[0].mxu0
  %v620 = vadd.f32 0.0, %v619
  %v621 = vpop.f32.mrb[0].mxu0
  %622 = vmatprep.mubr.f32.mxu0 0.0
  %623 = vmatmul.mubr.f32.gmra.mrb[0].mxu0 %v449
  %v624 = vpop.f32.mrb[0].mxu0
  %v625 = vadd.f32 0.0, %v624
  %v626 = vpop.f32.mrb[0].mxu0
  %627 = vmatprep.mubr.f32.mxu0 0.0
  %628 = vmatmul.mubr.f32.gmra.mrb[0].mxu0 %v452
  %v629 = vpop.f32.mrb[0].mxu0
  %v630 = vadd.f32 0.0, %v629
  %v631 = vpop.f32.mrb[0].mxu0
  %632 = vmatprep.mubr.f32.mxu0 0.0
  %633 = vmatmul.mubr.f32.gmra.mrb[0].mxu0 %v455
  %v634 = vpop.f32.mrb[0].mxu0
  %v635 = vadd.f32 0.0, %v634
  %v636 = vpop.f32.mrb[0].mxu0
  %637 = vmatprep.mubr.f32.mxu0 0.0
  %638 = vmatmul.mubr.f32.gmra.mrb[0].mxu0 %v458
  %v639 = vpop.f32.mrb[0].mxu0
  %v640 = vadd.f32 0.0, %v639
  %v641 = vpop.f32.mrb[0].mxu0
  %642 = vmatprep.mubr.f32.mxu0 0.0
  %643 = vmatmul.mubr.f32.gmra.mrb[0].mxu0 %v461
  %v644 = vpop.f32.mrb[0].mxu0
  %v645 = vadd.f32 0.0, %v644
  %v646 = vpop.f32.mrb[0].mxu0
  %647 = vmatprep.mubr.f32.mxu0 0.0
  %648 = vmatmul.mubr.f32.gmra.mrb[0].mxu0 %v464
  %v649 = vpop.f32.mrb[0].mxu0
  %v650 = vadd.f32 0.0, %v649
  %v651 = vpop.f32.mrb[0].mxu0
  %652 = vmatprep.mubr.f32.mxu0 0.0
  %653 = vmatmul.mubr.f32.gmra.mrb[0].mxu0 %v467
  %v654 = vpop.f32.mrb[0].mxu0
  %v655 = vadd.f32 0.0, %v654
  %v656 = vpop.f32.mrb[0].mxu0
  %657 = vmatprep.mubr.f32.mxu0 0.0
  %658 = vmatmul.mubr.f32.gmra.mrb[0].mxu0 %v470
  %v659 = vpop.f32.mrb[0].mxu0
  %v660 = vadd.f32 0.0, %v659
  %v661 = vpop.f32.mrb[0].mxu0
  %662 = vmatprep.mubr.f32.mxu0 0.0
  %663 = vmatmul.mubr.f32.gmra.mrb[0].mxu0 %v473
  %v664 = vpop.f32.mrb[0].mxu0
  %v665 = vadd.f32 0.0, %v664
  %v666 = vpop.f32.mrb[0].mxu0
  %667 = vmatprep.mubr.f32.mxu0 0.0
  %668 = vmatmul.mubr.f32.gmra.mrb[0].mxu0 %v476
  %v669 = vpop.f32.mrb[0].mxu0
  %v670 = vadd.f32 0.0, %v669
  %v671 = vpop.f32.mrb[0].mxu0
  %672 = vmatprep.mubr.f32.mxu0 0.0
  %673 = vmatmul.mubr.f32.gmra.mrb[0].mxu0 %v479
  %v674 = vpop.f32.mrb[0].mxu0
  %v675 = vadd.f32 0.0, %v674
  %v676 = vpop.f32.mrb[0].mxu0
  %677 = vmatprep.mubr.f32.mxu0 0.0
  %678 = vmatmul.mubr.f32.gmra.mrb[0].mxu0 %v482
  %v679 = vpop.f32.mrb[0].mxu0
  %v680 = vadd.f32 0.0, %v679
  %v681 = vpop.f32.mrb[0].mxu0
  %682 = vmatprep.mubr.f32.mxu0 0.0
  %683 = vmatmul.mubr.f32.gmra.mrb[0].mxu0 %v485
  %v684 = vpop.f32.mrb[0].mxu0
  %v685 = vadd.f32 0.0, %v684
  %v686 = vpop.f32.mrb[0].mxu0
  %687 = vmatprep.mubr.f32.mxu0 0.0
  %688 = vmatmul.mubr.f32.gmra.mrb[0].mxu0 %v488
  %v689 = vpop.f32.mrb[0].mxu0
  %v690 = vadd.f32 0.0, %v689
  %v691 = vpop.f32.mrb[0].mxu0
  %692 = vmatprep.mubr.f32.mxu0 0.0
  %693 = vmatmul.mubr.f32.gmra.mrb[0].mxu0 %v491
  %v694 = vpop.f32.mrb[0].mxu0
  %v695 = vadd.f32 0.0, %v694
  %v696 = vpop.f32.mrb[0].mxu0
  %697 = vmatprep.mubr.f32.mxu0 0.0
  %698 = vmatmul.mubr.f32.gmra.mrb[0].mxu0 %v494
  %v699 = vpop.f32.mrb[0].mxu0
  %v700 = vadd.f32 0.0, %v699
  %v701 = vpop.f32.mrb[0].mxu0
  %702 = vmatprep.mubr.f32.mxu0 0.0
  %703 = vmatmul.mubr.f32.gmra.mrb[0].mxu0 %v497
  %v704 = vpop.f32.mrb[0].mxu0
  %v705 = vadd.f32 0.0, %v704
  %v706 = vpop.f32.mrb[0].mxu0
  %707 = vmatprep.mubr.f32.mxu0 0.0
  %708 = vmatmul.mubr.f32.gmra.mrb[0].mxu0 %v500
  %v709 = vpop.f32.mrb[0].mxu0
  %v710 = vadd.f32 0.0, %v709
  %v711 = vpop.f32.mrb[0].mxu0
  %712 = vmatprep.mubr.f32.mxu0 0.0
  %713 = vmatmul.mubr.f32.gmra.mrb[0].mxu0 %v503
  %v714 = vpop.f32.mrb[0].mxu0
  %v715 = vadd.f32 0.0, %v714
  %v716 = vpop.f32.mrb[0].mxu0
  %717 = vmatprep.mubr.f32.mxu0 0.0
  %718 = vmatmul.mubr.f32.gmra.mrb[0].mxu0 %v506
  %v719 = vpop.f32.mrb[0].mxu0
  %v720 = vadd.f32 0.0, %v719
  %v721 = vpop.f32.mrb[0].mxu0
  %722 = vmatprep.mubr.f32.mxu0 0.0
  %723 = vmatmul.mubr.f32.gmra.mrb[0].mxu0 %v509
  %v724 = vpop.f32.mrb[0].mxu0
  %v725 = vadd.f32 0.0, %v724
  %v726 = vpop.f32.mrb[0].mxu0
  %727 = vmatprep.mubr.f32.mxu0 0.0
  %728 = vmatmul.mubr.f32.gmra.mrb[0].mxu0 %v512
  %v729 = vpop.f32.mrb[0].mxu0
  %v730 = vadd.f32 0.0, %v729
  %v731 = vpop.f32.mrb[0].mxu0
  %732 = vmatprep.mubr.f32.mxu0 0.0
  %733 = vmatmul.mubr.f32.gmra.mrb[0].mxu0 %v515
  %v734 = vpop.f32.mrb[0].mxu0
  %v735 = vadd.f32 0.0, %v734
  %v736 = vpop.f32.mrb[0].mxu0
  %737 = vmatprep.mubr.f32.mxu0 0.0
  %738 = vmatmul.mubr.f32.gmra.mrb[0].mxu0 %v518
  %v739 = vpop.f32.mrb[0].mxu0
  %v740 = vadd.f32 0.0, %v739
  %v741 = vpop.f32.mrb[0].mxu0
  %742 = vmatprep.mubr.f32.mxu0 0.0
  %743 = vmatmul.mubr.f32.gmra.mrb[0].mxu0 %v521
  %v744 = vpop.f32.mrb[0].mxu0
  %v745 = vadd.f32 0.0, %v744
  %v746 = vpop.f32.mrb[0].mxu0
  %747 = vmatprep.mubr.f32.mxu0 0.0
  %748 = vmatmul.mubr.f32.gmra.mrb[0].mxu0 %v524
  %v749 = vpop.f32.mrb[0].mxu0
  %v750 = vadd.f32 0.0, %v749
  %v751 = vpop.f32.mrb[0].mxu0
  %752 = vmatprep.mubr.f32.mxu0 0.0
  %753 = vmatmul.mubr.f32.gmra.mrb[0].mxu0 %v527
  %v754 = vpop.f32.mrb[0].mxu0
  %v755 = vadd.f32 0.0, %v754
  %v756 = vpop.f32.mrb[0].mxu0
  %757 = vmatprep.mubr.f32.mxu0 0.0
  %758 = vmatmul.mubr.f32.gmra.mrb[0].mxu0 %v530
  %v759 = vpop.f32.mrb[0].mxu0
  %v760 = vadd.f32 0.0, %v759
  %v761 = vpop.f32.mrb[0].mxu0
  %762 = vmatprep.mubr.f32.mxu0 0.0
  %763 = vmatmul.mubr.f32.gmra.mrb[0].mxu0 %v533
  %v764 = vpop.f32.mrb[0].mxu0
  %v765 = vadd.f32 0.0, %v764
  %v766 = vpop.f32.mrb[0].mxu0
  %767 = vmatprep.mubr.f32.mxu0 0.0
  %768 = vmatmul.mubr.f32.gmra.mrb[0].mxu0 %v536
  %v769 = vpop.f32.mrb[0].mxu0
  %v770 = vadd.f32 0.0, %v769
  %v771 = vpop.f32.mrb[0].mxu0
  %772 = vmatprep.mubr.f32.mxu0 0.0
  %773 = vmatmul.mubr.f32.gmra.mrb[0].mxu0 %v539
  %v774 = vpop.f32.mrb[0].mxu0
  %v775 = vadd.f32 0.0, %v774
  %v776 = vpop.f32.mrb[0].mxu0
  %777 = vmatprep.mubr.f32.mxu0 0.0
  %778 = vmatmul.mubr.f32.gmra.mrb[0].mxu0 %v542
  %v779 = vpop.f32.mrb[0].mxu0
  %v780 = vadd.f32 0.0, %v779
  %v781 = vpop.f32.mrb[0].mxu0
  %782 = vmatprep.mubr.f32.mxu0 0.0
  %783 = vmatmul.mubr.f32.gmra.mrb[0].mxu0 %v545
  %v784 = vpop.f32.mrb[0].mxu0
  %v785 = vadd.f32 0.0, %v784
  %v786 = vpop.f32.mrb[0].mxu0
  %787 = vmatprep.mubr.f32.mxu0 0.0
  %788 = vmatmul.mubr.f32.gmra.mrb[0].mxu0 %v548
  %v789 = vpop.f32.mrb[0].mxu0
  %v790 = vadd.f32 0.0, %v789
  %v791 = vpop.f32.mrb[0].mxu0
  %792 = vmatprep.mubr.f32.mxu0 0.0
  %793 = vmatmul.mubr.f32.gmra.mrb[0].mxu0 %v551
  %v794 = vpop.f32.mrb[0].mxu0
  %v795 = vadd.f32 0.0, %v794
  %v796 = vpop.f32.mrb[0].mxu0
  %797 = vdwg.mxu0
  %s798 = scalar_lea.vmem %s0, 576
  %v799 = vld [vmem:[%s798] sm:$0xff]
  %v800 = vld [vmem:[%s798 + $0x8] sm:$0xff]
  %v801 = vld [vmem:[%s798 + $0x10] sm:$0xff]
  %v802 = vld [vmem:[%s798 + $0x18] sm:$0xff]
  %v803 = vld [vmem:[%s798 + $0x20] sm:$0xff]
  %v804 = vld [vmem:[%s798 + $0x28] sm:$0xff]
  %v805 = vld [vmem:[%s798 + $0x30] sm:$0xff]
  %v806 = vld [vmem:[%s798 + $0x38] sm:$0xff]
  %v807 = vld [vmem:[%s798 + $0x40] sm:$0xff]
  %v808 = vld [vmem:[%s798 + $0x48] sm:$0xff]
  %v809 = vld [vmem:[%s798 + $0x50] sm:$0xff]
  %v810 = vld [vmem:[%s798 + $0x58] sm:$0xff]
  %v811 = vld [vmem:[%s798 + $0x60] sm:$0xff]
  %v812 = vld [vmem:[%s798 + $0x68] sm:$0xff]
  %v813 = vld [vmem:[%s798 + $0x70] sm:$0xff]
  %v814 = vld [vmem:[%s798 + $0x78] sm:$0xff]
  %v815 = vld [vmem:[%s798 + $0x80] sm:$0xff]
  %v816 = vld [vmem:[%s798 + $0x88] sm:$0xff]
  %v817 = vld [vmem:[%s798 + $0x90] sm:$0xff]
  %v818 = vld [vmem:[%s798 + $0x98] sm:$0xff]
  %v819 = vld [vmem:[%s798 + $0xa0] sm:$0xff]
  %v820 = vld [vmem:[%s798 + $0xa8] sm:$0xff]
  %v821 = vld [vmem:[%s798 + $0xb0] sm:$0xff]
  %v822 = vld [vmem:[%s798 + $0xb8] sm:$0xff]
  %v823 = vld [vmem:[%s798 + $0xc0] sm:$0xff]
  %v824 = vld [vmem:[%s798 + $0xc8] sm:$0xff]
  %v825 = vld [vmem:[%s798 + $0xd0] sm:$0xff]
  %v826 = vld [vmem:[%s798 + $0xd8] sm:$0xff]
  %v827 = vld [vmem:[%s798 + $0xe0] sm:$0xff]
  %v828 = vld [vmem:[%s798 + $0xe8] sm:$0xff]
  %v829 = vld [vmem:[%s798 + $0xf0] sm:$0xff]
  %v830 = vld [vmem:[%s798 + $0xf8] sm:$0xff]
  %v831 = vld [vmem:[%s798 + $0x100] sm:$0xff]
  %v832 = vld [vmem:[%s798 + $0x108] sm:$0xff]
  %v833 = vld [vmem:[%s798 + $0x110] sm:$0xff]
  %v834 = vld [vmem:[%s798 + $0x118] sm:$0xff]
  %v836 = vsel %vm54, %v799, 0
  %v839 = vsel %vm54, %v800, 0
  %v842 = vsel %vm54, %v801, 0
  %v845 = vsel %vm54, %v802, 0
  %v848 = vsel %vm54, %v803, 0
  %v851 = vsel %vm54, %v804, 0
  %v854 = vsel %vm54, %v805, 0
  %v857 = vsel %vm54, %v806, 0
  %v860 = vsel %vm54, %v807, 0
  %v863 = vsel %vm54, %v808, 0
  %v866 = vsel %vm54, %v809, 0
  %v869 = vsel %vm54, %v810, 0
  %v872 = vsel %vm54, %v811, 0
  %v875 = vsel %vm54, %v812, 0
  %v878 = vsel %vm54, %v813, 0
  %v881 = vsel %vm54, %v814, 0
  %v884 = vsel %vm54, %v815, 0
  %v887 = vsel %vm54, %v816, 0
  %v890 = vsel %vm54, %v817, 0
  %v893 = vsel %vm54, %v818, 0
  %v896 = vsel %vm54, %v819, 0
  %v899 = vsel %vm54, %v820, 0
  %v902 = vsel %vm54, %v821, 0
  %v905 = vsel %vm54, %v822, 0
  %v908 = vsel %vm54, %v823, 0
  %v911 = vsel %vm54, %v824, 0
  %v914 = vsel %vm54, %v825, 0
  %v917 = vsel %vm54, %v826, 0
  %v920 = vsel %vm54, %v827, 0
  %v923 = vsel %vm54, %v828, 0
  %v926 = vsel %vm54, %v829, 0
  %v929 = vsel %vm54, %v830, 0
  %v932 = vsel %vm54, %v831, 0
  %v935 = vsel %vm54, %v832, 0
  %v938 = vsel %vm54, %v833, 0
  %v941 = vsel %vm54, %v834, 0
  %943 = vmatprep.subr.mxu0 0.0
  %944 = vmatpush1.msra.mxu0 %v14
  %945 = vmatprep.subr.mxu0 0.0
  %946 = vmatpush1.msra.mxu0 %v15
  %947 = vmatprep.subr.mxu0 0.0
  %948 = vmatpush1.msra.mxu0 %v16
  %949 = vmatprep.subr.mxu0 0.0
  %950 = vmatpush1.msra.mxu0 %v17
  %951 = vmatprep.subr.mxu0 0.0
  %952 = vmatpush1.msra.mxu0 0.0
  %953 = vmatprep.subr.mxu0 0.0
  %954 = vmatpush1.msra.mxu0 0.0
  %955 = vmatprep.subr.mxu0 0.0
  %956 = vmatpush1.msra.mxu0 0.0
  %957 = vmatprep.subr.mxu0 0.0
  %958 = vmatpush1.msra.mxu0 0.0
  %959 = vmatprep.subr.mxu0 0.0
  %960 = vmatpush1.msra.mxu0 0.0
  %961 = vmatprep.subr.mxu0 0.0
  %962 = vmatpush1.msra.mxu0 0.0
  %963 = vmatprep.subr.mxu0 0.0
  %964 = vmatpush1.msra.mxu0 0.0
  %965 = vmatprep.subr.mxu0 0.0
  %966 = vmatpush1.msra.mxu0 0.0
  %967 = vmatprep.subr.mxu0 0.0
  %968 = vmatpush1.msra.mxu0 0.0
  %969 = vmatprep.subr.mxu0 0.0
  %970 = vmatpush1.msra.mxu0 0.0
  %971 = vmatprep.subr.mxu0 0.0
  %972 = vmatpush1.msra.mxu0 0.0
  %973 = vmatprep.subr.mxu0 0.0
  %974 = vmatpush1.msra.mxu0 0.0
  %975 = vmatprep.subr.mxu0 0.0
  %976 = vmatpush1.msra.mxu0 0.0
  %977 = vmatprep.subr.mxu0 0.0
  %978 = vmatpush1.msra.mxu0 0.0
  %979 = vmatprep.subr.mxu0 0.0
  %980 = vmatpush1.msra.mxu0 0.0
  %981 = vmatprep.subr.mxu0 0.0
  %982 = vmatpush1.msra.mxu0 0.0
  %983 = vmatprep.subr.mxu0 0.0
  %984 = vmatpush1.msra.mxu0 0.0
  %985 = vmatprep.subr.mxu0 0.0
  %986 = vmatpush1.msra.mxu0 0.0
  %987 = vmatprep.subr.mxu0 0.0
  %988 = vmatpush1.msra.mxu0 0.0
  %989 = vmatprep.subr.mxu0 0.0
  %990 = vmatpush1.msra.mxu0 0.0
  %991 = vmatprep.subr.mxu0 0.0
  %992 = vmatpush1.msra.mxu0 0.0
  %993 = vmatprep.subr.mxu0 0.0
  %994 = vmatpush1.msra.mxu0 0.0
  %995 = vmatprep.subr.mxu0 0.0
  %996 = vmatpush1.msra.mxu0 0.0
  %997 = vmatprep.subr.mxu0 0.0
  %998 = vmatpush1.msra.mxu0 0.0
  %999 = vmatprep.subr.mxu0 0.0
  %1000 = vmatpush1.msra.mxu0 0.0
  %1001 = vmatprep.subr.mxu0 0.0
  %1002 = vmatpush1.msra.mxu0 0.0
  %1003 = vmatprep.subr.mxu0 0.0
  %1004 = vmatpush1.msra.mxu0 0.0
  %1005 = vmatprep.subr.mxu0 0.0
  %1006 = vmatpush1.msra.mxu0 0.0
  %1007 = vmatprep.mubr.f32.mxu0 0.0
  %1008 = vmatmul.mubr.f32.gmra.mrb[0].mxu0 %v836
  %v1009 = vpop.f32.mrb[0].mxu0
  %v1010 = vadd.f32 0.0, %v1009
  %v1011 = vpop.f32.mrb[0].mxu0
  %1012 = vmatprep.mubr.f32.mxu0 0.0
  %1013 = vmatmul.mubr.f32.gmra.mrb[0].mxu0 %v839
  %v1014 = vpop.f32.mrb[0].mxu0
  %v1015 = vadd.f32 0.0, %v1014
  %v1016 = vpop.f32.mrb[0].mxu0
  %1017 = vmatprep.mubr.f32.mxu0 0.0
  %1018 = vmatmul.mubr.f32.gmra.mrb[0].mxu0 %v842
  %v1019 = vpop.f32.mrb[0].mxu0
  %v1020 = vadd.f32 0.0, %v1019
  %v1021 = vpop.f32.mrb[0].mxu0
  %1022 = vmatprep.mubr.f32.mxu0 0.0
  %1023 = vmatmul.mubr.f32.gmra.mrb[0].mxu0 %v845
  %v1024 = vpop.f32.mrb[0].mxu0
  %v1025 = vadd.f32 0.0, %v1024
  %v1026 = vpop.f32.mrb[0].mxu0
  %1027 = vmatprep.mubr.f32.mxu0 0.0
  %1028 = vmatmul.mubr.f32.gmra.mrb[0].mxu0 %v848
  %v1029 = vpop.f32.mrb[0].mxu0
  %v1030 = vadd.f32 0.0, %v1029
  %v1031 = vpop.f32.mrb[0].mxu0
  %1032 = vmatprep.mubr.f32.mxu0 0.0
  %1033 = vmatmul.mubr.f32.gmra.mrb[0].mxu0 %v851
  %v1034 = vpop.f32.mrb[0].mxu0
  %v1035 = vadd.f32 0.0, %v1034
  %v1036 = vpop.f32.mrb[0].mxu0
  %1037 = vmatprep.mubr.f32.mxu0 0.0
  %1038 = vmatmul.mubr.f32.gmra.mrb[0].mxu0 %v854
  %v1039 = vpop.f32.mrb[0].mxu0
  %v1040 = vadd.f32 0.0, %v1039
  %v1041 = vpop.f32.mrb[0].mxu0
  %1042 = vmatprep.mubr.f32.mxu0 0.0
  %1043 = vmatmul.mubr.f32.gmra.mrb[0].mxu0 %v857
  %v1044 = vpop.f32.mrb[0].mxu0
  %v1045 = vadd.f32 0.0, %v1044
  %v1046 = vpop.f32.mrb[0].mxu0
  %1047 = vmatprep.mubr.f32.mxu0 0.0
  %1048 = vmatmul.mubr.f32.gmra.mrb[0].mxu0 %v860
  %v1049 = vpop.f32.mrb[0].mxu0
  %v1050 = vadd.f32 0.0, %v1049
  %v1051 = vpop.f32.mrb[0].mxu0
  %1052 = vmatprep.mubr.f32.mxu0 0.0
  %1053 = vmatmul.mubr.f32.gmra.mrb[0].mxu0 %v863
  %v1054 = vpop.f32.mrb[0].mxu0
  %v1055 = vadd.f32 0.0, %v1054
  %v1056 = vpop.f32.mrb[0].mxu0
  %1057 = vmatprep.mubr.f32.mxu0 0.0
  %1058 = vmatmul.mubr.f32.gmra.mrb[0].mxu0 %v866
  %v1059 = vpop.f32.mrb[0].mxu0
  %v1060 = vadd.f32 0.0, %v1059
  %v1061 = vpop.f32.mrb[0].mxu0
  %1062 = vmatprep.mubr.f32.mxu0 0.0
  %1063 = vmatmul.mubr.f32.gmra.mrb[0].mxu0 %v869
  %v1064 = vpop.f32.mrb[0].mxu0
  %v1065 = vadd.f32 0.0, %v1064
  %v1066 = vpop.f32.mrb[0].mxu0
  %1067 = vmatprep.mubr.f32.mxu0 0.0
  %1068 = vmatmul.mubr.f32.gmra.mrb[0].mxu0 %v872
  %v1069 = vpop.f32.mrb[0].mxu0
  %v1070 = vadd.f32 0.0, %v1069
  %v1071 = vpop.f32.mrb[0].mxu0
  %1072 = vmatprep.mubr.f32.mxu0 0.0
  %1073 = vmatmul.mubr.f32.gmra.mrb[0].mxu0 %v875
  %v1074 = vpop.f32.mrb[0].mxu0
  %v1075 = vadd.f32 0.0, %v1074
  %v1076 = vpop.f32.mrb[0].mxu0
  %1077 = vmatprep.mubr.f32.mxu0 0.0
  %1078 = vmatmul.mubr.f32.gmra.mrb[0].mxu0 %v878
  %v1079 = vpop.f32.mrb[0].mxu0
  %v1080 = vadd.f32 0.0, %v1079
  %v1081 = vpop.f32.mrb[0].mxu0
  %1082 = vmatprep.mubr.f32.mxu0 0.0
  %1083 = vmatmul.mubr.f32.gmra.mrb[0].mxu0 %v881
  %v1084 = vpop.f32.mrb[0].mxu0
  %v1085 = vadd.f32 0.0, %v1084
  %v1086 = vpop.f32.mrb[0].mxu0
  %1087 = vmatprep.mubr.f32.mxu0 0.0
  %1088 = vmatmul.mubr.f32.gmra.mrb[0].mxu0 %v884
  %v1089 = vpop.f32.mrb[0].mxu0
  %v1090 = vadd.f32 0.0, %v1089
  %v1091 = vpop.f32.mrb[0].mxu0
  %1092 = vmatprep.mubr.f32.mxu0 0.0
  %1093 = vmatmul.mubr.f32.gmra.mrb[0].mxu0 %v887
  %v1094 = vpop.f32.mrb[0].mxu0
  %v1095 = vadd.f32 0.0, %v1094
  %v1096 = vpop.f32.mrb[0].mxu0
  %1097 = vmatprep.mubr.f32.mxu0 0.0
  %1098 = vmatmul.mubr.f32.gmra.mrb[0].mxu0 %v890
  %v1099 = vpop.f32.mrb[0].mxu0
  %v1100 = vadd.f32 0.0, %v1099
  %v1101 = vpop.f32.mrb[0].mxu0
  %1102 = vmatprep.mubr.f32.mxu0 0.0
  %1103 = vmatmul.mubr.f32.gmra.mrb[0].mxu0 %v893
  %v1104 = vpop.f32.mrb[0].mxu0
  %v1105 = vadd.f32 0.0, %v1104
  %v1106 = vpop.f32.mrb[0].mxu0
  %1107 = vmatprep.mubr.f32.mxu0 0.0
  %1108 = vmatmul.mubr.f32.gmra.mrb[0].mxu0 %v896
  %v1109 = vpop.f32.mrb[0].mxu0
  %v1110 = vadd.f32 0.0, %v1109
  %v1111 = vpop.f32.mrb[0].mxu0
  %1112 = vmatprep.mubr.f32.mxu0 0.0
  %1113 = vmatmul.mubr.f32.gmra.mrb[0].mxu0 %v899
  %v1114 = vpop.f32.mrb[0].mxu0
  %v1115 = vadd.f32 0.0, %v1114
  %v1116 = vpop.f32.mrb[0].mxu0
  %1117 = vmatprep.mubr.f32.mxu0 0.0
  %1118 = vmatmul.mubr.f32.gmra.mrb[0].mxu0 %v902
  %v1119 = vpop.f32.mrb[0].mxu0
  %v1120 = vadd.f32 0.0, %v1119
  %v1121 = vpop.f32.mrb[0].mxu0
  %1122 = vmatprep.mubr.f32.mxu0 0.0
  %1123 = vmatmul.mubr.f32.gmra.mrb[0].mxu0 %v905
  %v1124 = vpop.f32.mrb[0].mxu0
  %v1125 = vadd.f32 0.0, %v1124
  %v1126 = vpop.f32.mrb[0].mxu0
  %1127 = vmatprep.mubr.f32.mxu0 0.0
  %1128 = vmatmul.mubr.f32.gmra.mrb[0].mxu0 %v908
  %v1129 = vpop.f32.mrb[0].mxu0
  %v1130 = vadd.f32 0.0, %v1129
  %v1131 = vpop.f32.mrb[0].mxu0
  %1132 = vmatprep.mubr.f32.mxu0 0.0
  %1133 = vmatmul.mubr.f32.gmra.mrb[0].mxu0 %v911
  %v1134 = vpop.f32.mrb[0].mxu0
  %v1135 = vadd.f32 0.0, %v1134
  %v1136 = vpop.f32.mrb[0].mxu0
  %1137 = vmatprep.mubr.f32.mxu0 0.0
  %1138 = vmatmul.mubr.f32.gmra.mrb[0].mxu0 %v914
  %v1139 = vpop.f32.mrb[0].mxu0
  %v1140 = vadd.f32 0.0, %v1139
  %v1141 = vpop.f32.mrb[0].mxu0
  %1142 = vmatprep.mubr.f32.mxu0 0.0
  %1143 = vmatmul.mubr.f32.gmra.mrb[0].mxu0 %v917
  %v1144 = vpop.f32.mrb[0].mxu0
  %v1145 = vadd.f32 0.0, %v1144
  %v1146 = vpop.f32.mrb[0].mxu0
  %1147 = vmatprep.mubr.f32.mxu0 0.0
  %1148 = vmatmul.mubr.f32.gmra.mrb[0].mxu0 %v920
  %v1149 = vpop.f32.mrb[0].mxu0
  %v1150 = vadd.f32 0.0, %v1149
  %v1151 = vpop.f32.mrb[0].mxu0
  %1152 = vmatprep.mubr.f32.mxu0 0.0
  %1153 = vmatmul.mubr.f32.gmra.mrb[0].mxu0 %v923
  %v1154 = vpop.f32.mrb[0].mxu0
  %v1155 = vadd.f32 0.0, %v1154
  %v1156 = vpop.f32.mrb[0].mxu0
  %1157 = vmatprep.mubr.f32.mxu0 0.0
  %1158 = vmatmul.mubr.f32.gmra.mrb[0].mxu0 %v926
  %v1159 = vpop.f32.mrb[0].mxu0
  %v1160 = vadd.f32 0.0, %v1159
  %v1161 = vpop.f32.mrb[0].mxu0
  %1162 = vmatprep.mubr.f32.mxu0 0.0
  %1163 = vmatmul.mubr.f32.gmra.mrb[0].mxu0 %v929
  %v1164 = vpop.f32.mrb[0].mxu0
  %v1165 = vadd.f32 0.0, %v1164
  %v1166 = vpop.f32.mrb[0].mxu0
  %1167 = vmatprep.mubr.f32.mxu0 0.0
  %1168 = vmatmul.mubr.f32.gmra.mrb[0].mxu0 %v932
  %v1169 = vpop.f32.mrb[0].mxu0
  %v1170 = vadd.f32 0.0, %v1169
  %v1171 = vpop.f32.mrb[0].mxu0
  %1172 = vmatprep.mubr.f32.mxu0 0.0
  %1173 = vmatmul.mubr.f32.gmra.mrb[0].mxu0 %v935
  %v1174 = vpop.f32.mrb[0].mxu0
  %v1175 = vadd.f32 0.0, %v1174
  %v1176 = vpop.f32.mrb[0].mxu0
  %1177 = vmatprep.mubr.f32.mxu0 0.0
  %1178 = vmatmul.mubr.f32.gmra.mrb[0].mxu0 %v938
  %v1179 = vpop.f32.mrb[0].mxu0
  %v1180 = vadd.f32 0.0, %v1179
  %v1181 = vpop.f32.mrb[0].mxu0
  %1182 = vmatprep.mubr.f32.mxu0 0.0
  %1183 = vmatmul.mubr.f32.gmra.mrb[0].mxu0 %v941
  %v1184 = vpop.f32.mrb[0].mxu0
  %v1185 = vadd.f32 0.0, %v1184
  %v1186 = vpop.f32.mrb[0].mxu0
  %1187 = vdwg.mxu0
  %s1188 = scalar_lea.vmem %s0, 864
  %v1189 = vld [vmem:[%s1188] sm:$0xff]
  %v1190 = vld [vmem:[%s1188 + $0x8] sm:$0xff]
  %v1191 = vld [vmem:[%s1188 + $0x10] sm:$0xff]
  %v1192 = vld [vmem:[%s1188 + $0x18] sm:$0xff]
  %v1193 = vld [vmem:[%s1188 + $0x20] sm:$0xff]
  %v1194 = vld [vmem:[%s1188 + $0x28] sm:$0xff]
  %v1195 = vld [vmem:[%s1188 + $0x30] sm:$0xff]
  %v1196 = vld [vmem:[%s1188 + $0x38] sm:$0xff]
  %v1197 = vld [vmem:[%s1188 + $0x40] sm:$0xff]
  %v1198 = vld [vmem:[%s1188 + $0x48] sm:$0xff]
  %v1199 = vld [vmem:[%s1188 + $0x50] sm:$0xff]
  %v1200 = vld [vmem:[%s1188 + $0x58] sm:$0xff]
  %v1201 = vld [vmem:[%s1188 + $0x60] sm:$0xff]
  %v1202 = vld [vmem:[%s1188 + $0x68] sm:$0xff]
  %v1203 = vld [vmem:[%s1188 + $0x70] sm:$0xff]
  %v1204 = vld [vmem:[%s1188 + $0x78] sm:$0xff]
  %v1205 = vld [vmem:[%s1188 + $0x80] sm:$0xff]
  %v1206 = vld [vmem:[%s1188 + $0x88] sm:$0xff]
  %v1207 = vld [vmem:[%s1188 + $0x90] sm:$0xff]
  %v1208 = vld [vmem:[%s1188 + $0x98] sm:$0xff]
  %v1209 = vld [vmem:[%s1188 + $0xa0] sm:$0xff]
  %v1210 = vld [vmem:[%s1188 + $0xa8] sm:$0xff]
  %v1211 = vld [vmem:[%s1188 + $0xb0] sm:$0xff]
  %v1212 = vld [vmem:[%s1188 + $0xb8] sm:$0xff]
  %v1213 = vld [vmem:[%s1188 + $0xc0] sm:$0xff]
  %v1214 = vld [vmem:[%s1188 + $0xc8] sm:$0xff]
  %v1215 = vld [vmem:[%s1188 + $0xd0] sm:$0xff]
  %v1216 = vld [vmem:[%s1188 + $0xd8] sm:$0xff]
  %v1217 = vld [vmem:[%s1188 + $0xe0] sm:$0xff]
  %v1218 = vld [vmem:[%s1188 + $0xe8] sm:$0xff]
  %v1219 = vld [vmem:[%s1188 + $0xf0] sm:$0xff]
  %v1220 = vld [vmem:[%s1188 + $0xf8] sm:$0xff]
  %v1221 = vld [vmem:[%s1188 + $0x100] sm:$0xff]
  %v1222 = vld [vmem:[%s1188 + $0x108] sm:$0xff]
  %v1223 = vld [vmem:[%s1188 + $0x110] sm:$0xff]
  %v1224 = vld [vmem:[%s1188 + $0x118] sm:$0xff]
  %v1226 = vsel %vm54, %v1189, 0
  %v1229 = vsel %vm54, %v1190, 0
  %v1232 = vsel %vm54, %v1191, 0
  %v1235 = vsel %vm54, %v1192, 0
  %v1238 = vsel %vm54, %v1193, 0
  %v1241 = vsel %vm54, %v1194, 0
  %v1244 = vsel %vm54, %v1195, 0
  %v1247 = vsel %vm54, %v1196, 0
  %v1250 = vsel %vm54, %v1197, 0
  %v1253 = vsel %vm54, %v1198, 0
  %v1256 = vsel %vm54, %v1199, 0
  %v1259 = vsel %vm54, %v1200, 0
  %v1262 = vsel %vm54, %v1201, 0
  %v1265 = vsel %vm54, %v1202, 0
  %v1268 = vsel %vm54, %v1203, 0
  %v1271 = vsel %vm54, %v1204, 0
  %v1274 = vsel %vm54, %v1205, 0
  %v1277 = vsel %vm54, %v1206, 0
  %v1280 = vsel %vm54, %v1207, 0
  %v1283 = vsel %vm54, %v1208, 0
  %v1286 = vsel %vm54, %v1209, 0
  %v1289 = vsel %vm54, %v1210, 0
  %v1292 = vsel %vm54, %v1211, 0
  %v1295 = vsel %vm54, %v1212, 0
  %v1298 = vsel %vm54, %v1213, 0
  %v1301 = vsel %vm54, %v1214, 0
  %v1304 = vsel %vm54, %v1215, 0
  %v1307 = vsel %vm54, %v1216, 0
  %v1310 = vsel %vm54, %v1217, 0
  %v1313 = vsel %vm54, %v1218, 0
  %v1316 = vsel %vm54, %v1219, 0
  %v1319 = vsel %vm54, %v1220, 0
  %v1322 = vsel %vm54, %v1221, 0
  %v1325 = vsel %vm54, %v1222, 0
  %v1328 = vsel %vm54, %v1223, 0
  %v1331 = vsel %vm54, %v1224, 0
  %1333 = vmatprep.subr.mxu0 0.0
  %1334 = vmatpush1.msra.mxu0 %v14
  %1335 = vmatprep.subr.mxu0 0.0
  %1336 = vmatpush1.msra.mxu0 %v15
  %1337 = vmatprep.subr.mxu0 0.0
  %1338 = vmatpush1.msra.mxu0 %v16
  %1339 = vmatprep.subr.mxu0 0.0
  %1340 = vmatpush1.msra.mxu0 %v17
  %1341 = vmatprep.subr.mxu0 0.0
  %1342 = vmatpush1.msra.mxu0 0.0
  %1343 = vmatprep.subr.mxu0 0.0
  %1344 = vmatpush1.msra.mxu0 0.0
  %1345 = vmatprep.subr.mxu0 0.0
  %1346 = vmatpush1.msra.mxu0 0.0
  %1347 = vmatprep.subr.mxu0 0.0
  %1348 = vmatpush1.msra.mxu0 0.0
  %1349 = vmatprep.subr.mxu0 0.0
  %1350 = vmatpush1.msra.mxu0 0.0
  %1351 = vmatprep.subr.mxu0 0.0
  %1352 = vmatpush1.msra.mxu0 0.0
  %1353 = vmatprep.subr.mxu0 0.0
  %1354 = vmatpush1.msra.mxu0 0.0
  %1355 = vmatprep.subr.mxu0 0.0
  %1356 = vmatpush1.msra.mxu0 0.0
  %1357 = vmatprep.subr.mxu0 0.0
  %1358 = vmatpush1.msra.mxu0 0.0
  %1359 = vmatprep.subr.mxu0 0.0
  %1360 = vmatpush1.msra.mxu0 0.0
  %1361 = vmatprep.subr.mxu0 0.0
  %1362 = vmatpush1.msra.mxu0 0.0
  %1363 = vmatprep.subr.mxu0 0.0
  %1364 = vmatpush1.msra.mxu0 0.0
  %1365 = vmatprep.subr.mxu0 0.0
  %1366 = vmatpush1.msra.mxu0 0.0
  %1367 = vmatprep.subr.mxu0 0.0
  %1368 = vmatpush1.msra.mxu0 0.0
  %1369 = vmatprep.subr.mxu0 0.0
  %1370 = vmatpush1.msra.mxu0 0.0
  %1371 = vmatprep.subr.mxu0 0.0
  %1372 = vmatpush1.msra.mxu0 0.0
  %1373 = vmatprep.subr.mxu0 0.0
  %1374 = vmatpush1.msra.mxu0 0.0
  %1375 = vmatprep.subr.mxu0 0.0
  %1376 = vmatpush1.msra.mxu0 0.0
  %1377 = vmatprep.subr.mxu0 0.0
  %1378 = vmatpush1.msra.mxu0 0.0
  %1379 = vmatprep.subr.mxu0 0.0
  %1380 = vmatpush1.msra.mxu0 0.0
  %1381 = vmatprep.subr.mxu0 0.0
  %1382 = vmatpush1.msra.mxu0 0.0
  %1383 = vmatprep.subr.mxu0 0.0
  %1384 = vmatpush1.msra.mxu0 0.0
  %1385 = vmatprep.subr.mxu0 0.0
  %1386 = vmatpush1.msra.mxu0 0.0
  %1387 = vmatprep.subr.mxu0 0.0
  %1388 = vmatpush1.msra.mxu0 0.0
  %1389 = vmatprep.subr.mxu0 0.0
  %1390 = vmatpush1.msra.mxu0 0.0
  %1391 = vmatprep.subr.mxu0 0.0
  %1392 = vmatpush1.msra.mxu0 0.0
  %1393 = vmatprep.subr.mxu0 0.0
  %1394 = vmatpush1.msra.mxu0 0.0
  %1395 = vmatprep.subr.mxu0 0.0
  %1396 = vmatpush1.msra.mxu0 0.0
  %1397 = vmatprep.mubr.f32.mxu0 0.0
  %1398 = vmatmul.mubr.f32.gmra.mrb[0].mxu0 %v1226
  %v1399 = vpop.f32.mrb[0].mxu0
  %v1400 = vadd.f32 0.0, %v1399
  %v1401 = vpop.f32.mrb[0].mxu0
  %1402 = vmatprep.mubr.f32.mxu0 0.0
  %1403 = vmatmul.mubr.f32.gmra.mrb[0].mxu0 %v1229
  %v1404 = vpop.f32.mrb[0].mxu0
  %v1405 = vadd.f32 0.0, %v1404
  %v1406 = vpop.f32.mrb[0].mxu0
  %1407 = vmatprep.mubr.f32.mxu0 0.0
  %1408 = vmatmul.mubr.f32.gmra.mrb[0].mxu0 %v1232
  %v1409 = vpop.f32.mrb[0].mxu0
  %v1410 = vadd.f32 0.0, %v1409
  %v1411 = vpop.f32.mrb[0].mxu0
  %1412 = vmatprep.mubr.f32.mxu0 0.0
  %1413 = vmatmul.mubr.f32.gmra.mrb[0].mxu0 %v1235
  %v1414 = vpop.f32.mrb[0].mxu0
  %v1415 = vadd.f32 0.0, %v1414
  %v1416 = vpop.f32.mrb[0].mxu0
  %1417 = vmatprep.mubr.f32.mxu0 0.0
  %1418 = vmatmul.mubr.f32.gmra.mrb[0].mxu0 %v1238
  %v1419 = vpop.f32.mrb[0].mxu0
  %v1420 = vadd.f32 0.0, %v1419
  %v1421 = vpop.f32.mrb[0].mxu0
  %1422 = vmatprep.mubr.f32.mxu0 0.0
  %1423 = vmatmul.mubr.f32.gmra.mrb[0].mxu0 %v1241
  %v1424 = vpop.f32.mrb[0].mxu0
  %v1425 = vadd.f32 0.0, %v1424
  %v1426 = vpop.f32.mrb[0].mxu0
  %1427 = vmatprep.mubr.f32.mxu0 0.0
  %1428 = vmatmul.mubr.f32.gmra.mrb[0].mxu0 %v1244
  %v1429 = vpop.f32.mrb[0].mxu0
  %v1430 = vadd.f32 0.0, %v1429
  %v1431 = vpop.f32.mrb[0].mxu0
  %1432 = vmatprep.mubr.f32.mxu0 0.0
  %1433 = vmatmul.mubr.f32.gmra.mrb[0].mxu0 %v1247
  %v1434 = vpop.f32.mrb[0].mxu0
  %v1435 = vadd.f32 0.0, %v1434
  %v1436 = vpop.f32.mrb[0].mxu0
  %1437 = vmatprep.mubr.f32.mxu0 0.0
  %1438 = vmatmul.mubr.f32.gmra.mrb[0].mxu0 %v1250
  %v1439 = vpop.f32.mrb[0].mxu0
  %v1440 = vadd.f32 0.0, %v1439
  %v1441 = vpop.f32.mrb[0].mxu0
  %1442 = vmatprep.mubr.f32.mxu0 0.0
  %1443 = vmatmul.mubr.f32.gmra.mrb[0].mxu0 %v1253
  %v1444 = vpop.f32.mrb[0].mxu0
  %v1445 = vadd.f32 0.0, %v1444
  %v1446 = vpop.f32.mrb[0].mxu0
  %1447 = vmatprep.mubr.f32.mxu0 0.0
  %1448 = vmatmul.mubr.f32.gmra.mrb[0].mxu0 %v1256
  %v1449 = vpop.f32.mrb[0].mxu0
  %v1450 = vadd.f32 0.0, %v1449
  %v1451 = vpop.f32.mrb[0].mxu0
  %1452 = vmatprep.mubr.f32.mxu0 0.0
  %1453 = vmatmul.mubr.f32.gmra.mrb[0].mxu0 %v1259
  %v1454 = vpop.f32.mrb[0].mxu0
  %v1455 = vadd.f32 0.0, %v1454
  %v1456 = vpop.f32.mrb[0].mxu0
  %1457 = vmatprep.mubr.f32.mxu0 0.0
  %1458 = vmatmul.mubr.f32.gmra.mrb[0].mxu0 %v1262
  %v1459 = vpop.f32.mrb[0].mxu0
  %v1460 = vadd.f32 0.0, %v1459
  %v1461 = vpop.f32.mrb[0].mxu0
  %1462 = vmatprep.mubr.f32.mxu0 0.0
  %1463 = vmatmul.mubr.f32.gmra.mrb[0].mxu0 %v1265
  %v1464 = vpop.f32.mrb[0].mxu0
  %v1465 = vadd.f32 0.0, %v1464
  %v1466 = vpop.f32.mrb[0].mxu0
  %1467 = vmatprep.mubr.f32.mxu0 0.0
  %1468 = vmatmul.mubr.f32.gmra.mrb[0].mxu0 %v1268
  %v1469 = vpop.f32.mrb[0].mxu0
  %v1470 = vadd.f32 0.0, %v1469
  %v1471 = vpop.f32.mrb[0].mxu0
  %1472 = vmatprep.mubr.f32.mxu0 0.0
  %1473 = vmatmul.mubr.f32.gmra.mrb[0].mxu0 %v1271
  %v1474 = vpop.f32.mrb[0].mxu0
  %v1475 = vadd.f32 0.0, %v1474
  %v1476 = vpop.f32.mrb[0].mxu0
  %1477 = vmatprep.mubr.f32.mxu0 0.0
  %1478 = vmatmul.mubr.f32.gmra.mrb[0].mxu0 %v1274
  %v1479 = vpop.f32.mrb[0].mxu0
  %v1480 = vadd.f32 0.0, %v1479
  %v1481 = vpop.f32.mrb[0].mxu0
  %1482 = vmatprep.mubr.f32.mxu0 0.0
  %1483 = vmatmul.mubr.f32.gmra.mrb[0].mxu0 %v1277
  %v1484 = vpop.f32.mrb[0].mxu0
  %v1485 = vadd.f32 0.0, %v1484
  %v1486 = vpop.f32.mrb[0].mxu0
  %1487 = vmatprep.mubr.f32.mxu0 0.0
  %1488 = vmatmul.mubr.f32.gmra.mrb[0].mxu0 %v1280
  %v1489 = vpop.f32.mrb[0].mxu0
  %v1490 = vadd.f32 0.0, %v1489
  %v1491 = vpop.f32.mrb[0].mxu0
  %1492 = vmatprep.mubr.f32.mxu0 0.0
  %1493 = vmatmul.mubr.f32.gmra.mrb[0].mxu0 %v1283
  %v1494 = vpop.f32.mrb[0].mxu0
  %v1495 = vadd.f32 0.0, %v1494
  %v1496 = vpop.f32.mrb[0].mxu0
  %1497 = vmatprep.mubr.f32.mxu0 0.0
  %1498 = vmatmul.mubr.f32.gmra.mrb[0].mxu0 %v1286
  %v1499 = vpop.f32.mrb[0].mxu0
  %v1500 = vadd.f32 0.0, %v1499
  %v1501 = vpop.f32.mrb[0].mxu0
  %1502 = vmatprep.mubr.f32.mxu0 0.0
  %1503 = vmatmul.mubr.f32.gmra.mrb[0].mxu0 %v1289
  %v1504 = vpop.f32.mrb[0].mxu0
  %v1505 = vadd.f32 0.0, %v1504
  %v1506 = vpop.f32.mrb[0].mxu0
  %1507 = vmatprep.mubr.f32.mxu0 0.0
  %1508 = vmatmul.mubr.f32.gmra.mrb[0].mxu0 %v1292
  %v1509 = vpop.f32.mrb[0].mxu0
  %v1510 = vadd.f32 0.0, %v1509
  %v1511 = vpop.f32.mrb[0].mxu0
  %1512 = vmatprep.mubr.f32.mxu0 0.0
  %1513 = vmatmul.mubr.f32.gmra.mrb[0].mxu0 %v1295
  %v1514 = vpop.f32.mrb[0].mxu0
  %v1515 = vadd.f32 0.0, %v1514
  %v1516 = vpop.f32.mrb[0].mxu0
  %1517 = vmatprep.mubr.f32.mxu0 0.0
  %1518 = vmatmul.mubr.f32.gmra.mrb[0].mxu0 %v1298
  %v1519 = vpop.f32.mrb[0].mxu0
  %v1520 = vadd.f32 0.0, %v1519
  %v1521 = vpop.f32.mrb[0].mxu0
  %1522 = vmatprep.mubr.f32.mxu0 0.0
  %1523 = vmatmul.mubr.f32.gmra.mrb[0].mxu0 %v1301
  %v1524 = vpop.f32.mrb[0].mxu0
  %v1525 = vadd.f32 0.0, %v1524
  %v1526 = vpop.f32.mrb[0].mxu0
  %1527 = vmatprep.mubr.f32.mxu0 0.0
  %1528 = vmatmul.mubr.f32.gmra.mrb[0].mxu0 %v1304
  %v1529 = vpop.f32.mrb[0].mxu0
  %v1530 = vadd.f32 0.0, %v1529
  %v1531 = vpop.f32.mrb[0].mxu0
  %1532 = vmatprep.mubr.f32.mxu0 0.0
  %1533 = vmatmul.mubr.f32.gmra.mrb[0].mxu0 %v1307
  %v1534 = vpop.f32.mrb[0].mxu0
  %v1535 = vadd.f32 0.0, %v1534
  %v1536 = vpop.f32.mrb[0].mxu0
  %1537 = vmatprep.mubr.f32.mxu0 0.0
  %1538 = vmatmul.mubr.f32.gmra.mrb[0].mxu0 %v1310
  %v1539 = vpop.f32.mrb[0].mxu0
  %v1540 = vadd.f32 0.0, %v1539
  %v1541 = vpop.f32.mrb[0].mxu0
  %1542 = vmatprep.mubr.f32.mxu0 0.0
  %1543 = vmatmul.mubr.f32.gmra.mrb[0].mxu0 %v1313
  %v1544 = vpop.f32.mrb[0].mxu0
  %v1545 = vadd.f32 0.0, %v1544
  %v1546 = vpop.f32.mrb[0].mxu0
  %1547 = vmatprep.mubr.f32.mxu0 0.0
  %1548 = vmatmul.mubr.f32.gmra.mrb[0].mxu0 %v1316
  %v1549 = vpop.f32.mrb[0].mxu0
  %v1550 = vadd.f32 0.0, %v1549
  %v1551 = vpop.f32.mrb[0].mxu0
  %1552 = vmatprep.mubr.f32.mxu0 0.0
  %1553 = vmatmul.mubr.f32.gmra.mrb[0].mxu0 %v1319
  %v1554 = vpop.f32.mrb[0].mxu0
  %v1555 = vadd.f32 0.0, %v1554
  %v1556 = vpop.f32.mrb[0].mxu0
  %1557 = vmatprep.mubr.f32.mxu0 0.0
  %1558 = vmatmul.mubr.f32.gmra.mrb[0].mxu0 %v1322
  %v1559 = vpop.f32.mrb[0].mxu0
  %v1560 = vadd.f32 0.0, %v1559
  %v1561 = vpop.f32.mrb[0].mxu0
  %1562 = vmatprep.mubr.f32.mxu0 0.0
  %1563 = vmatmul.mubr.f32.gmra.mrb[0].mxu0 %v1325
  %v1564 = vpop.f32.mrb[0].mxu0
  %v1565 = vadd.f32 0.0, %v1564
  %v1566 = vpop.f32.mrb[0].mxu0
  %1567 = vmatprep.mubr.f32.mxu0 0.0
  %1568 = vmatmul.mubr.f32.gmra.mrb[0].mxu0 %v1328
  %v1569 = vpop.f32.mrb[0].mxu0
  %v1570 = vadd.f32 0.0, %v1569
  %v1571 = vpop.f32.mrb[0].mxu0
  %1572 = vmatprep.mubr.f32.mxu0 0.0
  %1573 = vmatmul.mubr.f32.gmra.mrb[0].mxu0 %v1331
  %v1574 = vpop.f32.mrb[0].mxu0
  %v1575 = vadd.f32 0.0, %v1574
  %v1576 = vpop.f32.mrb[0].mxu0
  %1577 = vdwg.mxu0
  %v1578 = vmax.f32 %v230, %v620
  %v1579 = vmax.f32 %v235, %v625
  %v1580 = vmax.f32 %v240, %v630
  %v1581 = vmax.f32 %v245, %v635
  %v1582 = vmax.f32 %v250, %v640
  %v1583 = vmax.f32 %v255, %v645
  %v1584 = vmax.f32 %v260, %v650
  %v1585 = vmax.f32 %v265, %v655
  %v1586 = vmax.f32 %v270, %v660
  %v1587 = vmax.f32 %v275, %v665
  %v1588 = vmax.f32 %v280, %v670
  %v1589 = vmax.f32 %v285, %v675
  %v1590 = vmax.f32 %v290, %v680
  %v1591 = vmax.f32 %v295, %v685
  %v1592 = vmax.f32 %v300, %v690
  %v1593 = vmax.f32 %v305, %v695
  %v1594 = vmax.f32 %v310, %v700
  %v1595 = vmax.f32 %v315, %v705
  %v1596 = vmax.f32 %v320, %v710
  %v1597 = vmax.f32 %v325, %v715
  %v1598 = vmax.f32 %v330, %v720
  %v1599 = vmax.f32 %v335, %v725
  %v1600 = vmax.f32 %v340, %v730
  %v1601 = vmax.f32 %v345, %v735
  %v1602 = vmax.f32 %v350, %v740
  %v1603 = vmax.f32 %v355, %v745
  %v1604 = vmax.f32 %v360, %v750
  %v1605 = vmax.f32 %v365, %v755
  %v1606 = vmax.f32 %v370, %v760
  %v1607 = vmax.f32 %v375, %v765
  %v1608 = vmax.f32 %v380, %v770
  %v1609 = vmax.f32 %v385, %v775
  %v1610 = vmax.f32 %v390, %v780
  %v1611 = vmax.f32 %v395, %v785
  %v1612 = vmax.f32 %v400, %v790
  %v1613 = vmax.f32 %v405, %v795
  %v1614 = vmax.f32 %v1010, %v1400
  %v1615 = vmax.f32 %v1015, %v1405
  %v1616 = vmax.f32 %v1020, %v1410
  %v1617 = vmax.f32 %v1025, %v1415
  %v1618 = vmax.f32 %v1030, %v1420
  %v1619 = vmax.f32 %v1035, %v1425
  %v1620 = vmax.f32 %v1040, %v1430
  %v1621 = vmax.f32 %v1045, %v1435
  %v1622 = vmax.f32 %v1050, %v1440
  %v1623 = vmax.f32 %v1055, %v1445
  %v1624 = vmax.f32 %v1060, %v1450
  %v1625 = vmax.f32 %v1065, %v1455
  %v1626 = vmax.f32 %v1070, %v1460
  %v1627 = vmax.f32 %v1075, %v1465
  %v1628 = vmax.f32 %v1080, %v1470
  %v1629 = vmax.f32 %v1085, %v1475
  %v1630 = vmax.f32 %v1090, %v1480
  %v1631 = vmax.f32 %v1095, %v1485
  %v1632 = vmax.f32 %v1100, %v1490
  %v1633 = vmax.f32 %v1105, %v1495
  %v1634 = vmax.f32 %v1110, %v1500
  %v1635 = vmax.f32 %v1115, %v1505
  %v1636 = vmax.f32 %v1120, %v1510
  %v1637 = vmax.f32 %v1125, %v1515
  %v1638 = vmax.f32 %v1130, %v1520
  %v1639 = vmax.f32 %v1135, %v1525
  %v1640 = vmax.f32 %v1140, %v1530
  %v1641 = vmax.f32 %v1145, %v1535
  %v1642 = vmax.f32 %v1150, %v1540
  %v1643 = vmax.f32 %v1155, %v1545
  %v1644 = vmax.f32 %v1160, %v1550
  %v1645 = vmax.f32 %v1165, %v1555
  %v1646 = vmax.f32 %v1170, %v1560
  %v1647 = vmax.f32 %v1175, %v1565
  %v1648 = vmax.f32 %v1180, %v1570
  %v1649 = vmax.f32 %v1185, %v1575
  %v1650 = vmax.f32 %v1578, %v1614
  %v1651 = vmax.f32 %v1579, %v1615
  %v1652 = vmax.f32 %v1580, %v1616
  %v1653 = vmax.f32 %v1581, %v1617
  %v1654 = vmax.f32 %v1582, %v1618
  %v1655 = vmax.f32 %v1583, %v1619
  %v1656 = vmax.f32 %v1584, %v1620
  %v1657 = vmax.f32 %v1585, %v1621
  %v1658 = vmax.f32 %v1586, %v1622
  %v1659 = vmax.f32 %v1587, %v1623
  %v1660 = vmax.f32 %v1588, %v1624
  %v1661 = vmax.f32 %v1589, %v1625
  %v1662 = vmax.f32 %v1590, %v1626
  %v1663 = vmax.f32 %v1591, %v1627
  %v1664 = vmax.f32 %v1592, %v1628
  %v1665 = vmax.f32 %v1593, %v1629
  %v1666 = vmax.f32 %v1594, %v1630
  %v1667 = vmax.f32 %v1595, %v1631
  %v1668 = vmax.f32 %v1596, %v1632
  %v1669 = vmax.f32 %v1597, %v1633
  %v1670 = vmax.f32 %v1598, %v1634
  %v1671 = vmax.f32 %v1599, %v1635
  %v1672 = vmax.f32 %v1600, %v1636
  %v1673 = vmax.f32 %v1601, %v1637
  %v1674 = vmax.f32 %v1602, %v1638
  %v1675 = vmax.f32 %v1603, %v1639
  %v1676 = vmax.f32 %v1604, %v1640
  %v1677 = vmax.f32 %v1605, %v1641
  %v1678 = vmax.f32 %v1606, %v1642
  %v1679 = vmax.f32 %v1607, %v1643
  %v1680 = vmax.f32 %v1608, %v1644
  %v1681 = vmax.f32 %v1609, %v1645
  %v1682 = vmax.f32 %v1610, %v1646
  %v1683 = vmax.f32 %v1611, %v1647
  %v1684 = vmax.f32 %v1612, %v1648
  %v1685 = vmax.f32 %v1613, %v1649
  %v1686 = vld [vmem:[%s2] sm:$0x1]
  %v1688 = vlaneseq
  %v1689 = vshrl.u32 %v1688, 7
  %v1690 = vsub.s32 0, %v1689
  %v1691 = vrot.slane %v1686, %v1690
  %v1693 = vadd.f32 %v1650, %v1691
  %v1694 = vadd.f32 %v1651, %v1691
  %v1695 = vadd.f32 %v1652, %v1691
  %v1696 = vadd.f32 %v1653, %v1691
  %v1697 = vadd.f32 %v1654, %v1691
  %v1698 = vadd.f32 %v1655, %v1691
  %v1699 = vadd.f32 %v1656, %v1691
  %v1700 = vadd.f32 %v1657, %v1691
  %v1701 = vadd.f32 %v1658, %v1691
  %v1702 = vadd.f32 %v1659, %v1691
  %v1703 = vadd.f32 %v1660, %v1691
  %v1704 = vadd.f32 %v1661, %v1691
  %v1705 = vadd.f32 %v1662, %v1691
  %v1706 = vadd.f32 %v1663, %v1691
  %v1707 = vadd.f32 %v1664, %v1691
  %v1708 = vadd.f32 %v1665, %v1691
  %v1709 = vadd.f32 %v1666, %v1691
  %v1710 = vadd.f32 %v1667, %v1691
  %v1711 = vadd.f32 %v1668, %v1691
  %v1712 = vadd.f32 %v1669, %v1691
  %v1713 = vadd.f32 %v1670, %v1691
  %v1714 = vadd.f32 %v1671, %v1691
  %v1715 = vadd.f32 %v1672, %v1691
  %v1716 = vadd.f32 %v1673, %v1691
  %v1717 = vadd.f32 %v1674, %v1691
  %v1718 = vadd.f32 %v1675, %v1691
  %v1719 = vadd.f32 %v1676, %v1691
  %v1720 = vadd.f32 %v1677, %v1691
  %v1721 = vadd.f32 %v1678, %v1691
  %v1722 = vadd.f32 %v1679, %v1691
  %v1723 = vadd.f32 %v1680, %v1691
  %v1724 = vadd.f32 %v1681, %v1691
  %v1725 = vadd.f32 %v1682, %v1691
  %v1726 = vadd.f32 %v1683, %v1691
  %v1727 = vadd.f32 %v1684, %v1691
  %v1728 = vadd.f32 %v1685, %v1691
  %v1729 = vmax.f32 %v1693, 0.0
  %v1730 = vmax.f32 %v1694, 0.0
  %v1731 = vmax.f32 %v1695, 0.0
  %v1732 = vmax.f32 %v1696, 0.0
  %v1733 = vmax.f32 %v1697, 0.0
  %v1734 = vmax.f32 %v1698, 0.0
  %v1735 = vmax.f32 %v1699, 0.0
  %v1736 = vmax.f32 %v1700, 0.0
  %v1737 = vmax.f32 %v1701, 0.0
  %v1738 = vmax.f32 %v1702, 0.0
  %v1739 = vmax.f32 %v1703, 0.0
  %v1740 = vmax.f32 %v1704, 0.0
  %v1741 = vmax.f32 %v1705, 0.0
  %v1742 = vmax.f32 %v1706, 0.0
  %v1743 = vmax.f32 %v1707, 0.0
  %v1744 = vmax.f32 %v1708, 0.0
  %v1745 = vmax.f32 %v1709, 0.0
  %v1746 = vmax.f32 %v1710, 0.0
  %v1747 = vmax.f32 %v1711, 0.0
  %v1748 = vmax.f32 %v1712, 0.0
  %v1749 = vmax.f32 %v1713, 0.0
  %v1750 = vmax.f32 %v1714, 0.0
  %v1751 = vmax.f32 %v1715, 0.0
  %v1752 = vmax.f32 %v1716, 0.0
  %v1753 = vmax.f32 %v1717, 0.0
  %v1754 = vmax.f32 %v1718, 0.0
  %v1755 = vmax.f32 %v1719, 0.0
  %v1756 = vmax.f32 %v1720, 0.0
  %v1757 = vmax.f32 %v1721, 0.0
  %v1758 = vmax.f32 %v1722, 0.0
  %v1759 = vmax.f32 %v1723, 0.0
  %v1760 = vmax.f32 %v1724, 0.0
  %v1761 = vmax.f32 %v1725, 0.0
  %v1762 = vmax.f32 %v1726, 0.0
  %v1763 = vmax.f32 %v1727, 0.0
  %v1764 = vmax.f32 %v1728, 0.0
  %1765 = vst [vmem:[%s3] sm:$0xff] %v1729
  %1766 = vst [vmem:[%s3 + $0x8] sm:$0xff] %v1730
  %1767 = vst [vmem:[%s3 + $0x10] sm:$0xff] %v1731
  %1768 = vst [vmem:[%s3 + $0x18] sm:$0xff] %v1732
  %1769 = vst [vmem:[%s3 + $0x20] sm:$0xff] %v1733
  %1770 = vst [vmem:[%s3 + $0x28] sm:$0xff] %v1734
  %1771 = vst [vmem:[%s3 + $0x30] sm:$0xff] %v1735
  %1772 = vst [vmem:[%s3 + $0x38] sm:$0xff] %v1736
  %1773 = vst [vmem:[%s3 + $0x40] sm:$0xff] %v1737
  %1774 = vst [vmem:[%s3 + $0x48] sm:$0xff] %v1738
  %1775 = vst [vmem:[%s3 + $0x50] sm:$0xff] %v1739
  %1776 = vst [vmem:[%s3 + $0x58] sm:$0xff] %v1740
  %1777 = vst [vmem:[%s3 + $0x60] sm:$0xff] %v1741
  %1778 = vst [vmem:[%s3 + $0x68] sm:$0xff] %v1742
  %1779 = vst [vmem:[%s3 + $0x70] sm:$0xff] %v1743
  %1780 = vst [vmem:[%s3 + $0x78] sm:$0xff] %v1744
  %1781 = vst [vmem:[%s3 + $0x80] sm:$0xff] %v1745
  %1782 = vst [vmem:[%s3 + $0x88] sm:$0xff] %v1746
  %1783 = vst [vmem:[%s3 + $0x90] sm:$0xff] %v1747
  %1784 = vst [vmem:[%s3 + $0x98] sm:$0xff] %v1748
  %1785 = vst [vmem:[%s3 + $0xa0] sm:$0xff] %v1749
  %1786 = vst [vmem:[%s3 + $0xa8] sm:$0xff] %v1750
  %1787 = vst [vmem:[%s3 + $0xb0] sm:$0xff] %v1751
  %1788 = vst [vmem:[%s3 + $0xb8] sm:$0xff] %v1752
  %1789 = vst [vmem:[%s3 + $0xc0] sm:$0xff] %v1753
  %1790 = vst [vmem:[%s3 + $0xc8] sm:$0xff] %v1754
  %1791 = vst [vmem:[%s3 + $0xd0] sm:$0xff] %v1755
  %1792 = vst [vmem:[%s3 + $0xd8] sm:$0xff] %v1756
  %1793 = vst [vmem:[%s3 + $0xe0] sm:$0xff] %v1757
  %1794 = vst [vmem:[%s3 + $0xe8] sm:$0xff] %v1758
  %1795 = vst [vmem:[%s3 + $0xf0] sm:$0xff] %v1759
  %1796 = vst [vmem:[%s3 + $0xf8] sm:$0xff] %v1760
  %1797 = vst [vmem:[%s3 + $0x100] sm:$0xff] %v1761
  %1798 = vst [vmem:[%s3 + $0x108] sm:$0xff] %v1762
  %1799 = vst [vmem:[%s3 + $0x110] sm:$0xff] %v1763
  %1800 = vst [vmem:[%s3 + $0x118] sm:$0xff] %v1764
  // Predicated region
  $region14: #{net_forward.3} parent=0 // pred_check
    _
  $region15: #{net_forward.3} parent=0 // pred_check_branch
    %1802 = sbr.rel (0) target = $region17
  $region16: #{net_forward.3} parent=0 // pred_region
    _
  $region17: #{net_forward.3} parent=0 // pred_fallthru
    _
  // Predicated region
  $region18: #{net_forward.3} parent=0 // pred_check
    _
  $region19: #{net_forward.3} parent=0 // pred_check_branch
    %1804 = sbr.rel (0) target = $region21
  $region20: #{net_forward.3} parent=0 // pred_region
    _
  $region21: #{net_forward.3} parent=0 // pred_fallthru
    _

// kernel: net_forward.5
$region0: #{net_forward.5}
  #allocation0 [shape = 'u32[]', space=smem, size = 0x4, offset = 0x4, fixed_abs, tag = 'smem constant byte address 0x4 - core index']
  #allocation1 [shape = 'u32[144,128]{1,0:T(1,128)}', space=vmem, size = 0x12000, scoped, tag = 'internal scratch']
  %s0 = inlined_call_operand.vmem [shape: f32[8,256], index: 0, kind: input, shape index: {}]
  %s1 = inlined_call_operand.vmem [shape: f32[256,128], index: 1, kind: input, shape index: {}]
  %s2 = inlined_call_operand.vmem [shape: f32[1,128], index: 2, kind: input, shape index: {}]
  %s3 = inlined_call_operand.vmem [shape: f32[128,128], index: 3, kind: input, shape index: {}]
  %s4 = inlined_call_operand.vmem [shape: f32[1,128], index: 4, kind: input, shape index: {}]
  %s5 = inlined_call_operand.vmem [shape: f32[128,128], index: 5, kind: input, shape index: {}]
  %s6 = inlined_call_operand.vmem [shape: f32[1,128], index: 6, kind: input, shape index: {}]
  %s7 = inlined_call_operand.vmem [shape: f32[8,128], index: 7, kind: output, shape index: {}]
  %s8 = sld [smem:[#allocation0]]
  $region38: #{net_forward.5} parent=0
    _
  %s10 = ssub.s32 1, %s8
  %s11 = scalar_select 0, %s10, %s8
  // Predicated region
  $region2: #{net_forward.5} parent=0 // pred_check
    _
  $region3: #{net_forward.5} parent=0 // pred_check_branch
    %13 = sbr.rel (0) target = $region5
  $region4: #{net_forward.5} parent=0 // pred_region
    _
  $region5: #{net_forward.5} parent=0 // pred_fallthru
    _
  // Predicated region
  $region6: #{net_forward.5} parent=0 // pred_check
    _
  $region7: #{net_forward.5} parent=0 // pred_check_branch
    %15 = sbr.rel (0) target = $region9
  $region8: #{net_forward.5} parent=0 // pred_region
    _
  $region9: #{net_forward.5} parent=0 // pred_fallthru
    _
  // Predicated region
  $region10: #{net_forward.5} parent=0 // pred_check
    _
  $region11: #{net_forward.5} parent=0 // pred_check_branch
    %17 = sbr.rel (0) target = $region13
  $region12: #{net_forward.5} parent=0 // pred_region
    _
  $region13: #{net_forward.5} parent=0 // pred_fallthru
    _
  // Predicated region
  $region14: #{net_forward.5} parent=0 // pred_check
    _
  $region15: #{net_forward.5} parent=0 // pred_check_branch
    %19 = sbr.rel (0) target = $region17
  $region16: #{net_forward.5} parent=0 // pred_region
    _
  $region17: #{net_forward.5} parent=0 // pred_fallthru
    _
  // Predicated region
  $region18: #{net_forward.5} parent=0 // pred_check
    _
  $region19: #{net_forward.5} parent=0 // pred_check_branch
    %21 = sbr.rel (0) target = $region21
  $region20: #{net_forward.5} parent=0 // pred_region
    _
  $region21: #{net_forward.5} parent=0 // pred_fallthru
    _
  // Predicated region
  $region22: #{net_forward.5} parent=0 // pred_check
    _
  $region23: #{net_forward.5} parent=0 // pred_check_branch
    %23 = sbr.rel (0) target = $region25
  $region24: #{net_forward.5} parent=0 // pred_region
    _
  $region25: #{net_forward.5} parent=0 // pred_fallthru
    _
  // Predicated region
  $region26: #{net_forward.5} parent=0 // pred_check
    _
  $region27: #{net_forward.5} parent=0 // pred_check_branch
    %25 = sbr.rel (0) target = $region29
  $region28: #{net_forward.5} parent=0 // pred_region
    _
  $region29: #{net_forward.5} parent=0 // pred_fallthru
    _
  %v26 = vld [vmem:[%s0] sm:$0xff]
  %v27 = vld [vmem:[%s0 + $0x8] sm:$0xff]
  %v28 = vld [vmem:[%s1] sm:$0xff]
  %v29 = vld [vmem:[%s1 + $0x8] sm:$0xff]
  %v30 = vld [vmem:[%s1 + $0x10] sm:$0xff]
  %v31 = vld [vmem:[%s1 + $0x18] sm:$0xff]
  %v32 = vld [vmem:[%s1 + $0x20] sm:$0xff]
  %v33 = vld [vmem:[%s1 + $0x28] sm:$0xff]
  %v34 = vld [vmem:[%s1 + $0x30] sm:$0xff]
  %v35 = vld [vmem:[%s1 + $0x38] sm:$0xff]
  %v36 = vld [vmem:[%s1 + $0x40] sm:$0xff]
  %v37 = vld [vmem:[%s1 + $0x48] sm:$0xff]
  %v38 = vld [vmem:[%s1 + $0x50] sm:$0xff]
  %v39 = vld [vmem:[%s1 + $0x58] sm:$0xff]
  %v40 = vld [vmem:[%s1 + $0x60] sm:$0xff]
  %v41 = vld [vmem:[%s1 + $0x68] sm:$0xff]
  %v42 = vld [vmem:[%s1 + $0x70] sm:$0xff]
  %v43 = vld [vmem:[%s1 + $0x78] sm:$0xff]
  %v44 = vld [vmem:[%s1 + $0x80] sm:$0xff]
  %v45 = vld [vmem:[%s1 + $0x88] sm:$0xff]
  %v46 = vld [vmem:[%s1 + $0x90] sm:$0xff]
  %v47 = vld [vmem:[%s1 + $0x98] sm:$0xff]
  %v48 = vld [vmem:[%s1 + $0xa0] sm:$0xff]
  %v49 = vld [vmem:[%s1 + $0xa8] sm:$0xff]
  %v50 = vld [vmem:[%s1 + $0xb0] sm:$0xff]
  %v51 = vld [vmem:[%s1 + $0xb8] sm:$0xff]
  %v52 = vld [vmem:[%s1 + $0xc0] sm:$0xff]
  %v53 = vld [vmem:[%s1 + $0xc8] sm:$0xff]
  %v54 = vld [vmem:[%s1 + $0xd0] sm:$0xff]
  %v55 = vld [vmem:[%s1 + $0xd8] sm:$0xff]
  %v56 = vld [vmem:[%s1 + $0xe0] sm:$0xff]
  %v57 = vld [vmem:[%s1 + $0xe8] sm:$0xff]
  %v58 = vld [vmem:[%s1 + $0xf0] sm:$0xff]
  %v59 = vld [vmem:[%s1 + $0xf8] sm:$0xff]
  %v60 = vld [vmem:[%s2] sm:$0x1]
  %v62 = vlaneseq
  %v63 = vshrl.u32 %v62, 7
  %v64 = vsub.s32 0, %v63
  %v65 = vrot.slane %v60, %v64
  %67 = vmatprep.subr.mxu0 0.0
  %68 = vmatpush1.msra.mxu0 %v28
  %69 = vmatprep.subr.mxu0 0.0
  %70 = vmatpush1.msra.mxu0 %v29
  %71 = vmatprep.subr.mxu0 0.0
  %72 = vmatpush1.msra.mxu0 %v30
  %73 = vmatprep.subr.mxu0 0.0
  %74 = vmatpush1.msra.mxu0 %v31
  %75 = vmatprep.subr.mxu0 0.0
  %76 = vmatpush1.msra.mxu0 %v32
  %77 = vmatprep.subr.mxu0 0.0
  %78 = vmatpush1.msra.mxu0 %v33
  %79 = vmatprep.subr.mxu0 0.0
  %80 = vmatpush1.msra.mxu0 %v34
  %81 = vmatprep.subr.mxu0 0.0
  %82 = vmatpush1.msra.mxu0 %v35
  %83 = vmatprep.subr.mxu0 0.0
  %84 = vmatpush1.msra.mxu0 %v36
  %85 = vmatprep.subr.mxu0 0.0
  %86 = vmatpush1.msra.mxu0 %v37
  %87 = vmatprep.subr.mxu0 0.0
  %88 = vmatpush1.msra.mxu0 %v38
  %89 = vmatprep.subr.mxu0 0.0
  %90 = vmatpush1.msra.mxu0 %v39
  %91 = vmatprep.subr.mxu0 0.0
  %92 = vmatpush1.msra.mxu0 %v40
  %93 = vmatprep.subr.mxu0 0.0
  %94 = vmatpush1.msra.mxu0 %v41
  %95 = vmatprep.subr.mxu0 0.0
  %96 = vmatpush1.msra.mxu0 %v42
  %97 = vmatprep.subr.mxu0 0.0
  %98 = vmatpush1.msra.mxu0 %v43
  %99 = vmatprep.subr.mxu0 0.0
  %100 = vmatpush1.msra.mxu0 %v44
  %101 = vmatprep.subr.mxu0 0.0
  %102 = vmatpush1.msra.mxu0 %v45
  %103 = vmatprep.subr.mxu0 0.0
  %104 = vmatpush1.msra.mxu0 %v46
  %105 = vmatprep.subr.mxu0 0.0
  %106 = vmatpush1.msra.mxu0 %v47
  %107 = vmatprep.subr.mxu0 0.0
  %108 = vmatpush1.msra.mxu0 %v48
  %109 = vmatprep.subr.mxu0 0.0
  %110 = vmatpush1.msra.mxu0 %v49
  %111 = vmatprep.subr.mxu0 0.0
  %112 = vmatpush1.msra.mxu0 %v50
  %113 = vmatprep.subr.mxu0 0.0
  %114 = vmatpush1.msra.mxu0 %v51
  %115 = vmatprep.subr.mxu0 0.0
  %116 = vmatpush1.msra.mxu0 %v52
  %117 = vmatprep.subr.mxu0 0.0
  %118 = vmatpush1.msra.mxu0 %v53
  %119 = vmatprep.subr.mxu0 0.0
  %120 = vmatpush1.msra.mxu0 %v54
  %121 = vmatprep.subr.mxu0 0.0
  %122 = vmatpush1.msra.mxu0 %v55
  %123 = vmatprep.subr.mxu0 0.0
  %124 = vmatpush1.msra.mxu0 %v56
  %125 = vmatprep.subr.mxu0 0.0
  %126 = vmatpush1.msra.mxu0 %v57
  %127 = vmatprep.subr.mxu0 0.0
  %128 = vmatpush1.msra.mxu0 %v58
  %129 = vmatprep.subr.mxu0 0.0
  %130 = vmatpush1.msra.mxu0 %v59
  %131 = vmatprep.mubr.f32.mxu0 %v27
  %132 = vmatmul.mubr.f32.gmra.mrb[0].mxu0 %v26
  %v133 = vpop.f32.mrb[0].mxu0
  %v134 = vadd.f32 %v65, %v133
  %v135 = vpop.f32.mrb[0].mxu0
  %136 = vdwg.mxu0
  %v137 = vmax.f32 %v134, 0.0
  %v138 = vld [vmem:[%s3] sm:$0xff]
  %v139 = vld [vmem:[%s3 + $0x8] sm:$0xff]
  %v140 = vld [vmem:[%s3 + $0x10] sm:$0xff]
  %v141 = vld [vmem:[%s3 + $0x18] sm:$0xff]
  %v142 = vld [vmem:[%s3 + $0x20] sm:$0xff]
  %v143 = vld [vmem:[%s3 + $0x28] sm:$0xff]
  %v144 = vld [vmem:[%s3 + $0x30] sm:$0xff]
  %v145 = vld [vmem:[%s3 + $0x38] sm:$0xff]
  %v146 = vld [vmem:[%s3 + $0x40] sm:$0xff]
  %v147 = vld [vmem:[%s3 + $0x48] sm:$0xff]
  %v148 = vld [vmem:[%s3 + $0x50] sm:$0xff]
  %v149 = vld [vmem:[%s3 + $0x58] sm:$0xff]
  %v150 = vld [vmem:[%s3 + $0x60] sm:$0xff]
  %v151 = vld [vmem:[%s3 + $0x68] sm:$0xff]
  %v152 = vld [vmem:[%s3 + $0x70] sm:$0xff]
  %v153 = vld [vmem:[%s3 + $0x78] sm:$0xff]
  %v154 = vld [vmem:[%s4] sm:$0x1]
  %v156 = vlaneseq
  %v157 = vshrl.u32 %v156, 7
  %v158 = vsub.s32 0, %v157
  %v159 = vrot.slane %v154, %v158
  %161 = vmatprep.subr.mxu0 0.0
  %162 = vmatpush1.msra.mxu0 %v138
  %163 = vmatprep.subr.mxu0 0.0
  %164 = vmatpush1.msra.mxu0 %v139
  %165 = vmatprep.subr.mxu0 0.0
  %166 = vmatpush1.msra.mxu0 %v140
  %167 = vmatprep.subr.mxu0 0.0
  %168 = vmatpush1.msra.mxu0 %v141
  %169 = vmatprep.subr.mxu0 0.0
  %170 = vmatpush1.msra.mxu0 %v142
  %171 = vmatprep.subr.mxu0 0.0
  %172 = vmatpush1.msra.mxu0 %v143
  %173 = vmatprep.subr.mxu0 0.0
  %174 = vmatpush1.msra.mxu0 %v144
  %175 = vmatprep.subr.mxu0 0.0
  %176 = vmatpush1.msra.mxu0 %v145
  %177 = vmatprep.subr.mxu0 0.0
  %178 = vmatpush1.msra.mxu0 %v146
  %179 = vmatprep.subr.mxu0 0.0
  %180 = vmatpush1.msra.mxu0 %v147
  %181 = vmatprep.subr.mxu0 0.0
  %182 = vmatpush1.msra.mxu0 %v148
  %183 = vmatprep.subr.mxu0 0.0
  %184 = vmatpush1.msra.mxu0 %v149
  %185 = vmatprep.subr.mxu0 0.0
  %186 = vmatpush1.msra.mxu0 %v150
  %187 = vmatprep.subr.mxu0 0.0
  %188 = vmatpush1.msra.mxu0 %v151
  %189 = vmatprep.subr.mxu0 0.0
  %190 = vmatpush1.msra.mxu0 %v152
  %191 = vmatprep.subr.mxu0 0.0
  %192 = vmatpush1.msra.mxu0 %v153
  %193 = vmatprep.subr.mxu0 0.0
  %194 = vmatpush1.msra.mxu0 0.0
  %195 = vmatprep.subr.mxu0 0.0
  %196 = vmatpush1.msra.mxu0 0.0
  %197 = vmatprep.subr.mxu0 0.0
  %198 = vmatpush1.msra.mxu0 0.0
  %199 = vmatprep.subr.mxu0 0.0
  %200 = vmatpush1.msra.mxu0 0.0
  %201 = vmatprep.subr.mxu0 0.0
  %202 = vmatpush1.msra.mxu0 0.0
  %203 = vmatprep.subr.mxu0 0.0
  %204 = vmatpush1.msra.mxu0 0.0
  %205 = vmatprep.subr.mxu0 0.0
  %206 = vmatpush1.msra.mxu0 0.0
  %207 = vmatprep.subr.mxu0 0.0
  %208 = vmatpush1.msra.mxu0 0.0
  %209 = vmatprep.subr.mxu0 0.0
  %210 = vmatpush1.msra.mxu0 0.0
  %211 = vmatprep.subr.mxu0 0.0
  %212 = vmatpush1.msra.mxu0 0.0
  %213 = vmatprep.subr.mxu0 0.0
  %214 = vmatpush1.msra.mxu0 0.0
  %215 = vmatprep.subr.mxu0 0.0
  %216 = vmatpush1.msra.mxu0 0.0
  %217 = vmatprep.subr.mxu0 0.0
  %218 = vmatpush1.msra.mxu0 0.0
  %219 = vmatprep.subr.mxu0 0.0
  %220 = vmatpush1.msra.mxu0 0.0
  %221 = vmatprep.subr.mxu0 0.0
  %222 = vmatpush1.msra.mxu0 0.0
  %223 = vmatprep.subr.mxu0 0.0
  %224 = vmatpush1.msra.mxu0 0.0
  %225 = vmatprep.mubr.f32.mxu0 0.0
  %226 = vmatmul.mubr.f32.gmra.mrb[0].mxu0 %v137
  %v227 = vpop.f32.mrb[0].mxu0
  %v228 = vadd.f32 %v159, %v227
  %v229 = vpop.f32.mrb[0].mxu0
  %230 = vdwg.mxu0
  %v231 = vmax.f32 %v228, 0.0
  %v232 = vld [vmem:[%s5] sm:$0xff]
  %v233 = vld [vmem:[%s5 + $0x8] sm:$0xff]
  %v234 = vld [vmem:[%s5 + $0x10] sm:$0xff]
  %v235 = vld [vmem:[%s5 + $0x18] sm:$0xff]
  %v236 = vld [vmem:[%s5 + $0x20] sm:$0xff]
  %v237 = vld [vmem:[%s5 + $0x28] sm:$0xff]
  %v238 = vld [vmem:[%s5 + $0x30] sm:$0xff]
  %v239 = vld [vmem:[%s5 + $0x38] sm:$0xff]
  %v240 = vld [vmem:[%s5 + $0x40] sm:$0xff]
  %v241 = vld [vmem:[%s5 + $0x48] sm:$0xff]
  %v242 = vld [vmem:[%s5 + $0x50] sm:$0xff]
  %v243 = vld [vmem:[%s5 + $0x58] sm:$0xff]
  %v244 = vld [vmem:[%s5 + $0x60] sm:$0xff]
  %v245 = vld [vmem:[%s5 + $0x68] sm:$0xff]
  %v246 = vld [vmem:[%s5 + $0x70] sm:$0xff]
  %v247 = vld [vmem:[%s5 + $0x78] sm:$0xff]
  %v248 = vld [vmem:[%s6] sm:$0x1]
  %v250 = vlaneseq
  %v251 = vshrl.u32 %v250, 7
  %v252 = vsub.s32 0, %v251
  %v253 = vrot.slane %v248, %v252
  %255 = vmatprep.subr.mxu0 0.0
  %256 = vmatpush1.msra.mxu0 %v232
  %257 = vmatprep.subr.mxu0 0.0
  %258 = vmatpush1.msra.mxu0 %v233
  %259 = vmatprep.subr.mxu0 0.0
  %260 = vmatpush1.msra.mxu0 %v234
  %261 = vmatprep.subr.mxu0 0.0
  %262 = vmatpush1.msra.mxu0 %v235
  %263 = vmatprep.subr.mxu0 0.0
  %264 = vmatpush1.msra.mxu0 %v236
  %265 = vmatprep.subr.mxu0 0.0
  %266 = vmatpush1.msra.mxu0 %v237
  %267 = vmatprep.subr.mxu0 0.0
  %268 = vmatpush1.msra.mxu0 %v238
  %269 = vmatprep.subr.mxu0 0.0
  %270 = vmatpush1.msra.mxu0 %v239
  %271 = vmatprep.subr.mxu0 0.0
  %272 = vmatpush1.msra.mxu0 %v240
  %273 = vmatprep.subr.mxu0 0.0
  %274 = vmatpush1.msra.mxu0 %v241
  %275 = vmatprep.subr.mxu0 0.0
  %276 = vmatpush1.msra.mxu0 %v242
  %277 = vmatprep.subr.mxu0 0.0
  %278 = vmatpush1.msra.mxu0 %v243
  %279 = vmatprep.subr.mxu0 0.0
  %280 = vmatpush1.msra.mxu0 %v244
  %281 = vmatprep.subr.mxu0 0.0
  %282 = vmatpush1.msra.mxu0 %v245
  %283 = vmatprep.subr.mxu0 0.0
  %284 = vmatpush1.msra.mxu0 %v246
  %285 = vmatprep.subr.mxu0 0.0
  %286 = vmatpush1.msra.mxu0 %v247
  %287 = vmatprep.subr.mxu0 0.0
  %288 = vmatpush1.msra.mxu0 0.0
  %289 = vmatprep.subr.mxu0 0.0
  %290 = vmatpush1.msra.mxu0 0.0
  %291 = vmatprep.subr.mxu0 0.0
  %292 = vmatpush1.msra.mxu0 0.0
  %293 = vmatprep.subr.mxu0 0.0
  %294 = vmatpush1.msra.mxu0 0.0
  %295 = vmatprep.subr.mxu0 0.0
  %296 = vmatpush1.msra.mxu0 0.0
  %297 = vmatprep.subr.mxu0 0.0
  %298 = vmatpush1.msra.mxu0 0.0
  %299 = vmatprep.subr.mxu0 0.0
  %300 = vmatpush1.msra.mxu0 0.0
  %301 = vmatprep.subr.mxu0 0.0
  %302 = vmatpush1.msra.mxu0 0.0
  %303 = vmatprep.subr.mxu0 0.0
  %304 = vmatpush1.msra.mxu0 0.0
  %305 = vmatprep.subr.mxu0 0.0
  %306 = vmatpush1.msra.mxu0 0.0
  %307 = vmatprep.subr.mxu0 0.0
  %308 = vmatpush1.msra.mxu0 0.0
  %309 = vmatprep.subr.mxu0 0.0
  %310 = vmatpush1.msra.mxu0 0.0
  %311 = vmatprep.subr.mxu0 0.0
  %312 = vmatpush1.msra.mxu0 0.0
  %313 = vmatprep.subr.mxu0 0.0
  %314 = vmatpush1.msra.mxu0 0.0
  %315 = vmatprep.subr.mxu0 0.0
  %316 = vmatpush1.msra.mxu0 0.0
  %317 = vmatprep.subr.mxu0 0.0
  %318 = vmatpush1.msra.mxu0 0.0
  %319 = vmatprep.mubr.f32.mxu0 0.0
  %320 = vmatmul.mubr.f32.gmra.mrb[0].mxu0 %v231
  %v321 = vpop.f32.mrb[0].mxu0
  %v322 = vadd.f32 %v253, %v321
  %v323 = vpop.f32.mrb[0].mxu0
  %324 = vdwg.mxu0
  %325 = vst [vmem:[%s7] sm:$0xff] %v322
  // Predicated region
  $region30: #{net_forward.5} parent=0 // pred_check
    _
  $region31: #{net_forward.5} parent=0 // pred_check_branch
    %327 = sbr.rel (0) target = $region33
  $region32: #{net_forward.5} parent=0 // pred_region
    _
  $region33: #{net_forward.5} parent=0 // pred_fallthru
    _
  // Predicated region
  $region34: #{net_forward.5} parent=0 // pred_check
    _
  $region35: #{net_forward.5} parent=0 // pred_check_branch
    %329 = sbr.rel (0) target = $region37
  $region36: #{net_forward.5} parent=0 // pred_region
    _
  $region37: #{net_forward.5} parent=0 // pred_fallthru
    _

// kernel: net_forward.4
$region0: #{net_forward.4}
  #allocation0 [shape = 'u32[]', space=smem, size = 0x4, offset = 0x4, fixed_abs, tag = 'smem constant byte address 0x4 - core index']
  #allocation1 [shape = 'u32[144,128]{1,0:T(1,128)}', space=vmem, size = 0x12000, scoped, tag = 'internal scratch']
  %s0 = inlined_call_operand.vmem [shape: f32[4,32,152], index: 0, kind: input, shape index: {}]
  %s1 = inlined_call_operand.vmem [shape: f32[152,128], index: 1, kind: input, shape index: {}]
  %s2 = inlined_call_operand.vmem [shape: f32[1,128], index: 2, kind: input, shape index: {}]
  %s3 = inlined_call_operand.vmem [shape: f32[32,128], index: 3, kind: output, shape index: {}]
  %s4 = sld [smem:[#allocation0]]
  $region22: #{net_forward.4} parent=0
    _
  %s6 = ssub.s32 1, %s4
  %s7 = scalar_select 0, %s6, %s4
  // Predicated region
  $region2: #{net_forward.4} parent=0 // pred_check
    _
  $region3: #{net_forward.4} parent=0 // pred_check_branch
    %9 = sbr.rel (0) target = $region5
  $region4: #{net_forward.4} parent=0 // pred_region
    _
  $region5: #{net_forward.4} parent=0 // pred_fallthru
    _
  // Predicated region
  $region6: #{net_forward.4} parent=0 // pred_check
    _
  $region7: #{net_forward.4} parent=0 // pred_check_branch
    %11 = sbr.rel (0) target = $region9
  $region8: #{net_forward.4} parent=0 // pred_region
    _
  $region9: #{net_forward.4} parent=0 // pred_fallthru
    _
  // Predicated region
  $region10: #{net_forward.4} parent=0 // pred_check
    _
  $region11: #{net_forward.4} parent=0 // pred_check_branch
    %13 = sbr.rel (0) target = $region13
  $region12: #{net_forward.4} parent=0 // pred_region
    _
  $region13: #{net_forward.4} parent=0 // pred_fallthru
    _
  %v14 = vld [vmem:[%s1] sm:$0xff]
  %v15 = vld [vmem:[%s1 + $0x8] sm:$0xff]
  %v16 = vld [vmem:[%s1 + $0x10] sm:$0xff]
  %v17 = vld [vmem:[%s1 + $0x18] sm:$0xff]
  %v18 = vld [vmem:[%s1 + $0x20] sm:$0xff]
  %v19 = vld [vmem:[%s1 + $0x28] sm:$0xff]
  %v20 = vld [vmem:[%s1 + $0x30] sm:$0xff]
  %v21 = vld [vmem:[%s1 + $0x38] sm:$0xff]
  %v22 = vld [vmem:[%s1 + $0x40] sm:$0xff]
  %v23 = vld [vmem:[%s1 + $0x48] sm:$0xff]
  %v24 = vld [vmem:[%s1 + $0x50] sm:$0xff]
  %v25 = vld [vmem:[%s1 + $0x58] sm:$0xff]
  %v26 = vld [vmem:[%s1 + $0x60] sm:$0xff]
  %v27 = vld [vmem:[%s1 + $0x68] sm:$0xff]
  %v28 = vld [vmem:[%s1 + $0x70] sm:$0xff]
  %v29 = vld [vmem:[%s1 + $0x78] sm:$0xff]
  %v30 = vld [vmem:[%s1 + $0x80] sm:$0xff]
  %v31 = vld [vmem:[%s1 + $0x88] sm:$0xff]
  %v32 = vld [vmem:[%s1 + $0x90] sm:$0xff]
  %v33 = vld [vmem:[%s0] sm:$0xff]
  %v34 = vld [vmem:[%s0 + $0x8] sm:$0xff]
  %v35 = vld [vmem:[%s0 + $0x10] sm:$0xff]
  %v36 = vld [vmem:[%s0 + $0x18] sm:$0xff]
  %v37 = vld [vmem:[%s0 + $0x20] sm:$0xff]
  %v38 = vld [vmem:[%s0 + $0x28] sm:$0xff]
  %v39 = vld [vmem:[%s0 + $0x30] sm:$0xff]
  %v40 = vld [vmem:[%s0 + $0x38] sm:$0xff]
  %vm41 = vcmask 195584
  %v43 = vsel %vm41, %v34, 0
  %v46 = vsel %vm41, %v36, 0
  %v49 = vsel %vm41, %v38, 0
  %v52 = vsel %vm41, %v40, 0
  %54 = vmatprep.subr.mxu0 0.0
  %55 = vmatpush1.msra.mxu0 %v14
  %56 = vmatprep.subr.mxu0 0.0
  %57 = vmatpush1.msra.mxu0 %v15
  %58 = vmatprep.subr.mxu0 0.0
  %59 = vmatpush1.msra.mxu0 %v16
  %60 = vmatprep.subr.mxu0 0.0
  %61 = vmatpush1.msra.mxu0 %v17
  %62 = vmatprep.subr.mxu0 0.0
  %63 = vmatpush1.msra.mxu0 %v18
  %64 = vmatprep.subr.mxu0 0.0
  %65 = vmatpush1.msra.mxu0 %v19
  %66 = vmatprep.subr.mxu0 0.0
  %67 = vmatpush1.msra.mxu0 %v20
  %68 = vmatprep.subr.mxu0 0.0
  %69 = vmatpush1.msra.mxu0 %v21
  %70 = vmatprep.subr.mxu0 0.0
  %71 = vmatpush1.msra.mxu0 %v22
  %72 = vmatprep.subr.mxu0 0.0
  %73 = vmatpush1.msra.mxu0 %v23
  %74 = vmatprep.subr.mxu0 0.0
  %75 = vmatpush1.msra.mxu0 %v24
  %76 = vmatprep.subr.mxu0 0.0
  %77 = vmatpush1.msra.mxu0 %v25
  %78 = vmatprep.subr.mxu0 0.0
  %79 = vmatpush1.msra.mxu0 %v26
  %80 = vmatprep.subr.mxu0 0.0
  %81 = vmatpush1.msra.mxu0 %v27
  %82 = vmatprep.subr.mxu0 0.0
  %83 = vmatpush1.msra.mxu0 %v28
  %84 = vmatprep.subr.mxu0 0.0
  %85 = vmatpush1.msra.mxu0 %v29
  %86 = vmatprep.subr.mxu0 0.0
  %87 = vmatpush1.msra.mxu0 %v30
  %88 = vmatprep.subr.mxu0 0.0
  %89 = vmatpush1.msra.mxu0 %v31
  %90 = vmatprep.subr.mxu0 0.0
  %91 = vmatpush1.msra.mxu0 %v32
  %92 = vmatprep.subr.mxu0 0.0
  %93 = vmatpush1.msra.mxu0 0.0
  %94 = vmatprep.subr.mxu0 0.0
  %95 = vmatpush1.msra.mxu0 0.0
  %96 = vmatprep.subr.mxu0 0.0
  %97 = vmatpush1.msra.mxu0 0.0
  %98 = vmatprep.subr.mxu0 0.0
  %99 = vmatpush1.msra.mxu0 0.0
  %100 = vmatprep.subr.mxu0 0.0
  %101 = vmatpush1.msra.mxu0 0.0
  %102 = vmatprep.subr.mxu0 0.0
  %103 = vmatpush1.msra.mxu0 0.0
  %104 = vmatprep.subr.mxu0 0.0
  %105 = vmatpush1.msra.mxu0 0.0
  %106 = vmatprep.subr.mxu0 0.0
  %107 = vmatpush1.msra.mxu0 0.0
  %108 = vmatprep.subr.mxu0 0.0
  %109 = vmatpush1.msra.mxu0 0.0
  %110 = vmatprep.subr.mxu0 0.0
  %111 = vmatpush1.msra.mxu0 0.0
  %112 = vmatprep.subr.mxu0 0.0
  %113 = vmatpush1.msra.mxu0 0.0
  %114 = vmatprep.subr.mxu0 0.0
  %115 = vmatpush1.msra.mxu0 0.0
  %116 = vmatprep.subr.mxu0 0.0
  %117 = vmatpush1.msra.mxu0 0.0
  %118 = vmatprep.mubr.f32.mxu0 %v43
  %119 = vmatmul.mubr.f32.gmra.mrb[0].mxu0 %v33
  %v120 = vpop.f32.mrb[0].mxu0
  %v121 = vadd.f32 0.0, %v120
  %v122 = vpop.f32.mrb[0].mxu0
  %123 = vmatprep.mubr.f32.mxu0 %v46
  %124 = vmatmul.mubr.f32.gmra.mrb[0].mxu0 %v35
  %v125 = vpop.f32.mrb[0].mxu0
  %v126 = vadd.f32 0.0, %v125
  %v127 = vpop.f32.mrb[0].mxu0
  %128 = vmatprep.mubr.f32.mxu0 %v49
  %129 = vmatmul.mubr.f32.gmra.mrb[0].mxu0 %v37
  %v130 = vpop.f32.mrb[0].mxu0
  %v131 = vadd.f32 0.0, %v130
  %v132 = vpop.f32.mrb[0].mxu0
  %133 = vmatprep.mubr.f32.mxu0 %v52
  %134 = vmatmul.mubr.f32.gmra.mrb[0].mxu0 %v39
  %v135 = vpop.f32.mrb[0].mxu0
  %v136 = vadd.f32 0.0, %v135
  %v137 = vpop.f32.mrb[0].mxu0
  %138 = vdwg.mxu0
  %s139 = scalar_lea.vmem %s0, 64
  %v140 = vld [vmem:[%s139] sm:$0xff]
  %v141 = vld [vmem:[%s139 + $0x8] sm:$0xff]
  %v142 = vld [vmem:[%s139 + $0x10] sm:$0xff]
  %v143 = vld [vmem:[%s139 + $0x18] sm:$0xff]
  %v144 = vld [vmem:[%s139 + $0x20] sm:$0xff]
  %v145 = vld [vmem:[%s139 + $0x28] sm:$0xff]
  %v146 = vld [vmem:[%s139 + $0x30] sm:$0xff]
  %v147 = vld [vmem:[%s139 + $0x38] sm:$0xff]
  %v149 = vsel %vm41, %v141, 0
  %v152 = vsel %vm41, %v143, 0
  %v155 = vsel %vm41, %v145, 0
  %v158 = vsel %vm41, %v147, 0
  %160 = vmatprep.subr.mxu0 0.0
  %161 = vmatpush1.msra.mxu0 %v14
  %162 = vmatprep.subr.mxu0 0.0
  %163 = vmatpush1.msra.mxu0 %v15
  %164 = vmatprep.subr.mxu0 0.0
  %165 = vmatpush1.msra.mxu0 %v16
  %166 = vmatprep.subr.mxu0 0.0
  %167 = vmatpush1.msra.mxu0 %v17
  %168 = vmatprep.subr.mxu0 0.0
  %169 = vmatpush1.msra.mxu0 %v18
  %170 = vmatprep.subr.mxu0 0.0
  %171 = vmatpush1.msra.mxu0 %v19
  %172 = vmatprep.subr.mxu0 0.0
  %173 = vmatpush1.msra.mxu0 %v20
  %174 = vmatprep.subr.mxu0 0.0
  %175 = vmatpush1.msra.mxu0 %v21
  %176 = vmatprep.subr.mxu0 0.0
  %177 = vmatpush1.msra.mxu0 %v22
  %178 = vmatprep.subr.mxu0 0.0
  %179 = vmatpush1.msra.mxu0 %v23
  %180 = vmatprep.subr.mxu0 0.0
  %181 = vmatpush1.msra.mxu0 %v24
  %182 = vmatprep.subr.mxu0 0.0
  %183 = vmatpush1.msra.mxu0 %v25
  %184 = vmatprep.subr.mxu0 0.0
  %185 = vmatpush1.msra.mxu0 %v26
  %186 = vmatprep.subr.mxu0 0.0
  %187 = vmatpush1.msra.mxu0 %v27
  %188 = vmatprep.subr.mxu0 0.0
  %189 = vmatpush1.msra.mxu0 %v28
  %190 = vmatprep.subr.mxu0 0.0
  %191 = vmatpush1.msra.mxu0 %v29
  %192 = vmatprep.subr.mxu0 0.0
  %193 = vmatpush1.msra.mxu0 %v30
  %194 = vmatprep.subr.mxu0 0.0
  %195 = vmatpush1.msra.mxu0 %v31
  %196 = vmatprep.subr.mxu0 0.0
  %197 = vmatpush1.msra.mxu0 %v32
  %198 = vmatprep.subr.mxu0 0.0
  %199 = vmatpush1.msra.mxu0 0.0
  %200 = vmatprep.subr.mxu0 0.0
  %201 = vmatpush1.msra.mxu0 0.0
  %202 = vmatprep.subr.mxu0 0.0
  %203 = vmatpush1.msra.mxu0 0.0
  %204 = vmatprep.subr.mxu0 0.0
  %205 = vmatpush1.msra.mxu0 0.0
  %206 = vmatprep.subr.mxu0 0.0
  %207 = vmatpush1.msra.mxu0 0.0
  %208 = vmatprep.subr.mxu0 0.0
  %209 = vmatpush1.msra.mxu0 0.0
  %210 = vmatprep.subr.mxu0 0.0
  %211 = vmatpush1.msra.mxu0 0.0
  %212 = vmatprep.subr.mxu0 0.0
  %213 = vmatpush1.msra.mxu0 0.0
  %214 = vmatprep.subr.mxu0 0.0
  %215 = vmatpush1.msra.mxu0 0.0
  %216 = vmatprep.subr.mxu0 0.0
  %217 = vmatpush1.msra.mxu0 0.0
  %218 = vmatprep.subr.mxu0 0.0
  %219 = vmatpush1.msra.mxu0 0.0
  %220 = vmatprep.subr.mxu0 0.0
  %221 = vmatpush1.msra.mxu0 0.0
  %222 = vmatprep.subr.mxu0 0.0
  %223 = vmatpush1.msra.mxu0 0.0
  %224 = vmatprep.mubr.f32.mxu0 %v149
  %225 = vmatmul.mubr.f32.gmra.mrb[0].mxu0 %v140
  %v226 = vpop.f32.mrb[0].mxu0
  %v227 = vadd.f32 0.0, %v226
  %v228 = vpop.f32.mrb[0].mxu0
  %229 = vmatprep.mubr.f32.mxu0 %v152
  %230 = vmatmul.mubr.f32.gmra.mrb[0].mxu0 %v142
  %v231 = vpop.f32.mrb[0].mxu0
  %v232 = vadd.f32 0.0, %v231
  %v233 = vpop.f32.mrb[0].mxu0
  %234 = vmatprep.mubr.f32.mxu0 %v155
  %235 = vmatmul.mubr.f32.gmra.mrb[0].mxu0 %v144
  %v236 = vpop.f32.mrb[0].mxu0
  %v237 = vadd.f32 0.0, %v236
  %v238 = vpop.f32.mrb[0].mxu0
  %239 = vmatprep.mubr.f32.mxu0 %v158
  %240 = vmatmul.mubr.f32.gmra.mrb[0].mxu0 %v146
  %v241 = vpop.f32.mrb[0].mxu0
  %v242 = vadd.f32 0.0, %v241
  %v243 = vpop.f32.mrb[0].mxu0
  %244 = vdwg.mxu0
  %s245 = scalar_lea.vmem %s0, 128
  %v246 = vld [vmem:[%s245] sm:$0xff]
  %v247 = vld [vmem:[%s245 + $0x8] sm:$0xff]
  %v248 = vld [vmem:[%s245 + $0x10] sm:$0xff]
  %v249 = vld [vmem:[%s245 + $0x18] sm:$0xff]
  %v250 = vld [vmem:[%s245 + $0x20] sm:$0xff]
  %v251 = vld [vmem:[%s245 + $0x28] sm:$0xff]
  %v252 = vld [vmem:[%s245 + $0x30] sm:$0xff]
  %v253 = vld [vmem:[%s245 + $0x38] sm:$0xff]
  %v255 = vsel %vm41, %v247, 0
  %v258 = vsel %vm41, %v249, 0
  %v261 = vsel %vm41, %v251, 0
  %v264 = vsel %vm41, %v253, 0
  %266 = vmatprep.subr.mxu0 0.0
  %267 = vmatpush1.msra.mxu0 %v14
  %268 = vmatprep.subr.mxu0 0.0
  %269 = vmatpush1.msra.mxu0 %v15
  %270 = vmatprep.subr.mxu0 0.0
  %271 = vmatpush1.msra.mxu0 %v16
  %272 = vmatprep.subr.mxu0 0.0
  %273 = vmatpush1.msra.mxu0 %v17
  %274 = vmatprep.subr.mxu0 0.0
  %275 = vmatpush1.msra.mxu0 %v18
  %276 = vmatprep.subr.mxu0 0.0
  %277 = vmatpush1.msra.mxu0 %v19
  %278 = vmatprep.subr.mxu0 0.0
  %279 = vmatpush1.msra.mxu0 %v20
  %280 = vmatprep.subr.mxu0 0.0
  %281 = vmatpush1.msra.mxu0 %v21
  %282 = vmatprep.subr.mxu0 0.0
  %283 = vmatpush1.msra.mxu0 %v22
  %284 = vmatprep.subr.mxu0 0.0
  %285 = vmatpush1.msra.mxu0 %v23
  %286 = vmatprep.subr.mxu0 0.0
  %287 = vmatpush1.msra.mxu0 %v24
  %288 = vmatprep.subr.mxu0 0.0
  %289 = vmatpush1.msra.mxu0 %v25
  %290 = vmatprep.subr.mxu0 0.0
  %291 = vmatpush1.msra.mxu0 %v26
  %292 = vmatprep.subr.mxu0 0.0
  %293 = vmatpush1.msra.mxu0 %v27
  %294 = vmatprep.subr.mxu0 0.0
  %295 = vmatpush1.msra.mxu0 %v28
  %296 = vmatprep.subr.mxu0 0.0
  %297 = vmatpush1.msra.mxu0 %v29
  %298 = vmatprep.subr.mxu0 0.0
  %299 = vmatpush1.msra.mxu0 %v30
  %300 = vmatprep.subr.mxu0 0.0
  %301 = vmatpush1.msra.mxu0 %v31
  %302 = vmatprep.subr.mxu0 0.0
  %303 = vmatpush1.msra.mxu0 %v32
  %304 = vmatprep.subr.mxu0 0.0
  %305 = vmatpush1.msra.mxu0 0.0
  %306 = vmatprep.subr.mxu0 0.0
  %307 = vmatpush1.msra.mxu0 0.0
  %308 = vmatprep.subr.mxu0 0.0
  %309 = vmatpush1.msra.mxu0 0.0
  %310 = vmatprep.subr.mxu0 0.0
  %311 = vmatpush1.msra.mxu0 0.0
  %312 = vmatprep.subr.mxu0 0.0
  %313 = vmatpush1.msra.mxu0 0.0
  %314 = vmatprep.subr.mxu0 0.0
  %315 = vmatpush1.msra.mxu0 0.0
  %316 = vmatprep.subr.mxu0 0.0
  %317 = vmatpush1.msra.mxu0 0.0
  %318 = vmatprep.subr.mxu0 0.0
  %319 = vmatpush1.msra.mxu0 0.0
  %320 = vmatprep.subr.mxu0 0.0
  %321 = vmatpush1.msra.mxu0 0.0
  %322 = vmatprep.subr.mxu0 0.0
  %323 = vmatpush1.msra.mxu0 0.0
  %324 = vmatprep.subr.mxu0 0.0
  %325 = vmatpush1.msra.mxu0 0.0
  %326 = vmatprep.subr.mxu0 0.0
  %327 = vmatpush1.msra.mxu0 0.0
  %328 = vmatprep.subr.mxu0 0.0
  %329 = vmatpush1.msra.mxu0 0.0
  %330 = vmatprep.mubr.f32.mxu0 %v255
  %331 = vmatmul.mubr.f32.gmra.mrb[0].mxu0 %v246
  %v332 = vpop.f32.mrb[0].mxu0
  %v333 = vadd.f32 0.0, %v332
  %v334 = vpop.f32.mrb[0].mxu0
  %335 = vmatprep.mubr.f32.mxu0 %v258
  %336 = vmatmul.mubr.f32.gmra.mrb[0].mxu0 %v248
  %v337 = vpop.f32.mrb[0].mxu0
  %v338 = vadd.f32 0.0, %v337
  %v339 = vpop.f32.mrb[0].mxu0
  %340 = vmatprep.mubr.f32.mxu0 %v261
  %341 = vmatmul.mubr.f32.gmra.mrb[0].mxu0 %v250
  %v342 = vpop.f32.mrb[0].mxu0
  %v343 = vadd.f32 0.0, %v342
  %v344 = vpop.f32.mrb[0].mxu0
  %345 = vmatprep.mubr.f32.mxu0 %v264
  %346 = vmatmul.mubr.f32.gmra.mrb[0].mxu0 %v252
  %v347 = vpop.f32.mrb[0].mxu0
  %v348 = vadd.f32 0.0, %v347
  %v349 = vpop.f32.mrb[0].mxu0
  %350 = vdwg.mxu0
  %s351 = scalar_lea.vmem %s0, 192
  %v352 = vld [vmem:[%s351] sm:$0xff]
  %v353 = vld [vmem:[%s351 + $0x8] sm:$0xff]
  %v354 = vld [vmem:[%s351 + $0x10] sm:$0xff]
  %v355 = vld [vmem:[%s351 + $0x18] sm:$0xff]
  %v356 = vld [vmem:[%s351 + $0x20] sm:$0xff]
  %v357 = vld [vmem:[%s351 + $0x28] sm:$0xff]
  %v358 = vld [vmem:[%s351 + $0x30] sm:$0xff]
  %v359 = vld [vmem:[%s351 + $0x38] sm:$0xff]
  %v361 = vsel %vm41, %v353, 0
  %v364 = vsel %vm41, %v355, 0
  %v367 = vsel %vm41, %v357, 0
  %v370 = vsel %vm41, %v359, 0
  %372 = vmatprep.subr.mxu0 0.0
  %373 = vmatpush1.msra.mxu0 %v14
  %374 = vmatprep.subr.mxu0 0.0
  %375 = vmatpush1.msra.mxu0 %v15
  %376 = vmatprep.subr.mxu0 0.0
  %377 = vmatpush1.msra.mxu0 %v16
  %378 = vmatprep.subr.mxu0 0.0
  %379 = vmatpush1.msra.mxu0 %v17
  %380 = vmatprep.subr.mxu0 0.0
  %381 = vmatpush1.msra.mxu0 %v18
  %382 = vmatprep.subr.mxu0 0.0
  %383 = vmatpush1.msra.mxu0 %v19
  %384 = vmatprep.subr.mxu0 0.0
  %385 = vmatpush1.msra.mxu0 %v20
  %386 = vmatprep.subr.mxu0 0.0
  %387 = vmatpush1.msra.mxu0 %v21
  %388 = vmatprep.subr.mxu0 0.0
  %389 = vmatpush1.msra.mxu0 %v22
  %390 = vmatprep.subr.mxu0 0.0
  %391 = vmatpush1.msra.mxu0 %v23
  %392 = vmatprep.subr.mxu0 0.0
  %393 = vmatpush1.msra.mxu0 %v24
  %394 = vmatprep.subr.mxu0 0.0
  %395 = vmatpush1.msra.mxu0 %v25
  %396 = vmatprep.subr.mxu0 0.0
  %397 = vmatpush1.msra.mxu0 %v26
  %398 = vmatprep.subr.mxu0 0.0
  %399 = vmatpush1.msra.mxu0 %v27
  %400 = vmatprep.subr.mxu0 0.0
  %401 = vmatpush1.msra.mxu0 %v28
  %402 = vmatprep.subr.mxu0 0.0
  %403 = vmatpush1.msra.mxu0 %v29
  %404 = vmatprep.subr.mxu0 0.0
  %405 = vmatpush1.msra.mxu0 %v30
  %406 = vmatprep.subr.mxu0 0.0
  %407 = vmatpush1.msra.mxu0 %v31
  %408 = vmatprep.subr.mxu0 0.0
  %409 = vmatpush1.msra.mxu0 %v32
  %410 = vmatprep.subr.mxu0 0.0
  %411 = vmatpush1.msra.mxu0 0.0
  %412 = vmatprep.subr.mxu0 0.0
  %413 = vmatpush1.msra.mxu0 0.0
  %414 = vmatprep.subr.mxu0 0.0
  %415 = vmatpush1.msra.mxu0 0.0
  %416 = vmatprep.subr.mxu0 0.0
  %417 = vmatpush1.msra.mxu0 0.0
  %418 = vmatprep.subr.mxu0 0.0
  %419 = vmatpush1.msra.mxu0 0.0
  %420 = vmatprep.subr.mxu0 0.0
  %421 = vmatpush1.msra.mxu0 0.0
  %422 = vmatprep.subr.mxu0 0.0
  %423 = vmatpush1.msra.mxu0 0.0
  %424 = vmatprep.subr.mxu0 0.0
  %425 = vmatpush1.msra.mxu0 0.0
  %426 = vmatprep.subr.mxu0 0.0
  %427 = vmatpush1.msra.mxu0 0.0
  %428 = vmatprep.subr.mxu0 0.0
  %429 = vmatpush1.msra.mxu0 0.0
  %430 = vmatprep.subr.mxu0 0.0
  %431 = vmatpush1.msra.mxu0 0.0
  %432 = vmatprep.subr.mxu0 0.0
  %433 = vmatpush1.msra.mxu0 0.0
  %434 = vmatprep.subr.mxu0 0.0
  %435 = vmatpush1.msra.mxu0 0.0
  %436 = vmatprep.mubr.f32.mxu0 %v361
  %437 = vmatmul.mubr.f32.gmra.mrb[0].mxu0 %v352
  %v438 = vpop.f32.mrb[0].mxu0
  %v439 = vadd.f32 0.0, %v438
  %v440 = vpop.f32.mrb[0].mxu0
  %441 = vmatprep.mubr.f32.mxu0 %v364
  %442 = vmatmul.mubr.f32.gmra.mrb[0].mxu0 %v354
  %v443 = vpop.f32.mrb[0].mxu0
  %v444 = vadd.f32 0.0, %v443
  %v445 = vpop.f32.mrb[0].mxu0
  %446 = vmatprep.mubr.f32.mxu0 %v367
  %447 = vmatmul.mubr.f32.gmra.mrb[0].mxu0 %v356
  %v448 = vpop.f32.mrb[0].mxu0
  %v449 = vadd.f32 0.0, %v448
  %v450 = vpop.f32.mrb[0].mxu0
  %451 = vmatprep.mubr.f32.mxu0 %v370
  %452 = vmatmul.mubr.f32.gmra.mrb[0].mxu0 %v358
  %v453 = vpop.f32.mrb[0].mxu0
  %v454 = vadd.f32 0.0, %v453
  %v455 = vpop.f32.mrb[0].mxu0
  %456 = vdwg.mxu0
  %v457 = vmax.f32 %v121, %v227
  %v458 = vmax.f32 %v126, %v232
  %v459 = vmax.f32 %v131, %v237
  %v460 = vmax.f32 %v136, %v242
  %v461 = vmax.f32 %v333, %v439
  %v462 = vmax.f32 %v338, %v444
  %v463 = vmax.f32 %v343, %v449
  %v464 = vmax.f32 %v348, %v454
  %v465 = vmax.f32 %v457, %v461
  %v466 = vmax.f32 %v458, %v462
  %v467 = vmax.f32 %v459, %v463
  %v468 = vmax.f32 %v460, %v464
  %v469 = vld [vmem:[%s2] sm:$0x1]
  %v471 = vlaneseq
  %v472 = vshrl.u32 %v471, 7
  %v473 = vsub.s32 0, %v472
  %v474 = vrot.slane %v469, %v473
  %v476 = vadd.f32 %v465, %v474
  %v477 = vadd.f32 %v466, %v474
  %v478 = vadd.f32 %v467, %v474
  %v479 = vadd.f32 %v468, %v474
  %v480 = vmax.f32 %v476, 0.0
  %v481 = vmax.f32 %v477, 0.0
  %v482 = vmax.f32 %v478, 0.0
  %v483 = vmax.f32 %v479, 0.0
  %484 = vst [vmem:[%s3] sm:$0xff] %v480
  %485 = vst [vmem:[%s3 + $0x8] sm:$0xff] %v481
  %486 = vst [vmem:[%s3 + $0x10] sm:$0xff] %v482
  %487 = vst [vmem:[%s3 + $0x18] sm:$0xff] %v483
  // Predicated region
  $region14: #{net_forward.4} parent=0 // pred_check
    _
  $region15: #{net_forward.4} parent=0 // pred_check_branch
    %489 = sbr.rel (0) target = $region17
  $region16: #{net_forward.4} parent=0 // pred_region
    _
  $region17: #{net_forward.4} parent=0 // pred_fallthru
    _
  // Predicated region
  $region18: #{net_forward.4} parent=0 // pred_check
    _
  $region19: #{net_forward.4} parent=0 // pred_check_branch
    %491 = sbr.rel (0) target = $region21
  $region20: #{net_forward.4} parent=0 // pred_region
    _
  $region21: #{net_forward.4} parent=0 // pred_fallthru
    _

</llo_original>
